<compile_context>
chip_gen: v7x
topology: tpu7x:2x2x1
jax: 0.10.0
libtpu: 0.0.40
codegen_flags: <defaults>
</compile_context>

<pallas_src>
import jax
import jax.numpy as jnp
from jax.experimental import pallas as pl
from jax.experimental.pallas import tpu as pltpu

LATENT_SIZE = 300
NUM_CLASSES = 4
NUM_PROTOTYPES = 8
PROTOTYPE_SIZE = 50
FUSED = NUM_PROTOTYPES * PROTOTYPE_SIZE   # 400
EPSILON = 1e-5        # epsilon in the l2 -> activation mapping
IN_EPS = 1e-5         # InstanceNorm1d default eps
OUT_PAD = 128         # lane-dense padded output width (sliced to NUM_CLASSES)
TILE_B_MAX = 512      # batch tile (multiple of 8); sized well within v7x VMEM


def _round_up(n, m):
    return ((n + m - 1) // m) * m


def _transform(inp, w1, b1, w2, b2):
    """Pure-JAX per-prototype transform: Linear -> InstanceNorm1d -> ReLU -> Linear."""
    h = jnp.dot(inp, w1, preferred_element_type=jnp.float32) + b1
    mean = jnp.mean(h, axis=-1, keepdims=True)
    var = jnp.mean((h - mean) ** 2, axis=-1, keepdims=True)
    h = (h - mean) * jax.lax.rsqrt(var + IN_EPS)
    h = jnp.maximum(h, 0.0)
    return jnp.dot(h, w2, preferred_element_type=jnp.float32) + b2


def pwnet_kernel(x_ref, w1_ref, b1_ref, w2_ref, b2_ref,
                 proto_ref, g_ref, gt_ref, cmat_ref, out_ref):
    x = x_ref[...]                                                  # (TB, 300)

    # Layer 1: all 8 prototype transforms fused on the lane axis.
    h = jnp.dot(x, w1_ref[...],
                preferred_element_type=jnp.float32) + b1_ref[...]   # (TB, 400)

    # Per-prototype InstanceNorm via indicator-matrix segmented sums (MXU, not XLU).
    g = g_ref[...]                                                  # (400, 8) 0/1 groups
    gt = gt_ref[...]                                                # (8, 400)
    inv_n = 1.0 / PROTOTYPE_SIZE
    mean = jnp.dot(h, g, preferred_element_type=jnp.float32) * inv_n        # (TB, 8)
    mean_b = jnp.dot(mean, gt, preferred_element_type=jnp.float32)          # (TB, 400)
    d = h - mean_b
    var = jnp.dot(d * d, g, preferred_element_type=jnp.float32) * inv_n     # (TB, 8)
    var_b = jnp.dot(var, gt, preferred_element_type=jnp.float32)            # (TB, 400)
    hn = jnp.maximum(d * jax.lax.rsqrt(var_b + IN_EPS), 0.0)                # (TB, 400)

    # Layer 2: block-diagonal fused weights (one lane-dense matmul).
    z = jnp.dot(hn, w2_ref[...],
                preferred_element_type=jnp.float32) + b2_ref[...]           # (TB, 400)

    # Per-prototype squared L2 distance to the hoisted prototypes.
    e = z - proto_ref[...]
    l2 = jnp.dot(e * e, g, preferred_element_type=jnp.float32)              # (TB, 8)
    act = jnp.log((l2 + 1.0) / (l2 + EPSILON))                              # (TB, 8)

    # Final linear (cmat zero-padded to 128 lanes) + tanh; lane-dense store.
    logits = jnp.dot(act, cmat_ref[...], preferred_element_type=jnp.float32)
    out_ref[...] = jnp.tanh(logits)                                         # (TB, 128)


@jax.jit
def pwnet_forward(x, nn_human_x, w1, b1, w2, b2, cmat):
    B = x.shape[0]

    # --- Hoisted prototype computation (done once, outside the batch loop) ---
    protos = jax.vmap(_transform)(nn_human_x[:, None, :], w1, b1, w2, b2)   # (P, 1, 50)
    proto_cat = protos.reshape(1, FUSED)                                    # (1, 400)

    # --- Weight fusion: prototypes concatenated on the lane axis ---
    w1_cat = jnp.transpose(w1, (1, 0, 2)).reshape(LATENT_SIZE, FUSED)       # (300, 400)
    b1_cat = b1.reshape(1, FUSED)                                           # (1, 400)
    b2_cat = b2.reshape(1, FUSED)                                           # (1, 400)
    # Block-diagonal second layer.  (On v5e one could keep 8 separate (50,50)
    # dots instead; the block-diag form is the win on v6e/v7x 256-wide MXUs.)
    w2_bd = jnp.zeros((FUSED, FUSED), jnp.float32)
    for i in range(NUM_PROTOTYPES):
        s = i * PROTOTYPE_SIZE
        w2_bd = w2_bd.at[s:s + PROTOTYPE_SIZE, s:s + PROTOTYPE_SIZE].set(w2[i])

    # Static group-indicator matrix for segmented (per-prototype) reductions.
    g = jnp.repeat(jnp.eye(NUM_PROTOTYPES, dtype=jnp.float32),
                   PROTOTYPE_SIZE, axis=0)                                  # (400, 8)
    gt = g.T                                                                # (8, 400)

    # Lane-dense final projection: zero-pad cmat's 4 columns out to 128.
    cmat_pad = jnp.zeros((NUM_PROTOTYPES, OUT_PAD),
                         jnp.float32).at[:, :NUM_CLASSES].set(cmat)

    # --- Batch grid: pad B up to a multiple of the tile ---
    tile_b = min(TILE_B_MAX, _round_up(B, 8))
    b_pad = _round_up(B, tile_b)
    xp = x if b_pad == B else jnp.pad(x, ((0, b_pad - B), (0, 0)))

    full = lambda i: (0, 0)          # weights/prototypes stay resident across the grid
    vmem = pltpu.MemorySpace.VMEM

    out = pl.pallas_call(
        pwnet_kernel,
        out_shape=jax.ShapeDtypeStruct((b_pad, OUT_PAD), jnp.float32),
        grid=(b_pad // tile_b,),
        in_specs=[
            pl.BlockSpec((tile_b, LATENT_SIZE), lambda i: (i, 0), memory_space=vmem),
            pl.BlockSpec(w1_cat.shape, full, memory_space=vmem),
            pl.BlockSpec(b1_cat.shape, full, memory_space=vmem),
            pl.BlockSpec(w2_bd.shape, full, memory_space=vmem),
            pl.BlockSpec(b2_cat.shape, full, memory_space=vmem),
            pl.BlockSpec(proto_cat.shape, full, memory_space=vmem),
            pl.BlockSpec(g.shape, full, memory_space=vmem),
            pl.BlockSpec(gt.shape, full, memory_space=vmem),
            pl.BlockSpec(cmat_pad.shape, full, memory_space=vmem),
        ],
        out_specs=pl.BlockSpec((tile_b, OUT_PAD), lambda i: (i, 0), memory_space=vmem),
        compiler_params=pltpu.CompilerParams(dimension_semantics=("parallel",)),
    )(xp, w1_cat, b1_cat, w2_bd, b2_cat, proto_cat, g, gt, cmat_pad)

    return out[:B, :NUM_CLASSES]


def make_params(key):
    """Deterministic synthetic parameter init (same shapes as the PyTorch module)."""
    k = jax.random.split(key, 6)
    s1 = 1.0 / jnp.sqrt(LATENT_SIZE)
    s2 = 1.0 / jnp.sqrt(PROTOTYPE_SIZE)
    w1 = jax.random.uniform(k[0], (NUM_PROTOTYPES, LATENT_SIZE, PROTOTYPE_SIZE),
                            jnp.float32, -s1, s1)
    b1 = jax.random.uniform(k[1], (NUM_PROTOTYPES, 1, PROTOTYPE_SIZE),
                            jnp.float32, -s1, s1)
    w2 = jax.random.uniform(k[2], (NUM_PROTOTYPES, PROTOTYPE_SIZE, PROTOTYPE_SIZE),
                            jnp.float32, -s2, s2)
    b2 = jax.random.uniform(k[3], (NUM_PROTOTYPES, 1, PROTOTYPE_SIZE),
                            jnp.float32, -s2, s2)
    nn_human_x = jax.random.normal(k[4], (NUM_PROTOTYPES, LATENT_SIZE), jnp.float32)
    # custom_weight_matrix (8, 4); linear(p_acts) == p_acts @ custom_weight_matrix.
    cmat = jnp.array([[1.0, 0.0, 0.0, 0.0],
                      [-1.0, 0.0, 0.0, 0.0],
                      [0.0, 1.0, 0.0, 0.0],
                      [0.0, -1.0, 0.0, 0.0],
                      [0.0, 0.0, 1.0, 0.0],
                      [0.0, 0.0, -1.0, 0.0],
                      [0.0, 0.0, 0.0, 1.0],
                      [0.0, 0.0, 0.0, -1.0]], dtype=jnp.float32)
    return nn_human_x, w1, b1, w2, b2, cmat


def pwnet_reference(x, nn_human_x, w1, b1, w2, b2, cmat):
    """Pure-JAX reference mirroring the PyTorch forward, for verification."""
    acts = []
    for i in range(NUM_PROTOTYPES):
        proto = _transform(nn_human_x[i:i + 1, :], w1[i], b1[i], w2[i], b2[i])
        z = _transform(x, w1[i], b1[i], w2[i], b2[i])
        l2 = jnp.sum((z - proto) ** 2, axis=-1, keepdims=True)
        acts.append(jnp.log((l2 + 1.0) / (l2 + EPSILON)))
    p_acts = jnp.concatenate(acts, axis=-1)
    return jnp.tanh(p_acts @ cmat)


if __name__ == "__main__":
    key = jax.random.PRNGKey(0)
    k_param, k_x = jax.random.split(key)
    params = make_params(k_param)

    B = 2
    x = jax.random.normal(k_x, (B, LATENT_SIZE), jnp.float32)

    out = pwnet_forward(x, *params)
    out = jax.block_until_ready(out)

    ref = pwnet_reference(x, *params)
    assert out.shape == (B, NUM_CLASSES)
    # Fused MXU segmented-sum formulation reorders f32 accumulation vs. the
    # straightforward reference; allow a slightly looser (still tight) tolerance.
    assert jnp.allclose(out, ref, atol=1e-4, rtol=1e-4), (out, ref)

    print("KERNEL_OK")
</pallas_src>

<mosaic_0001>
module attributes {stable_mosaic.version = 11 : i64} {
  func.func @pwnet_kernel(%arg0: i32, %arg1: memref<8x300xf32, #tpu.memory_space<vmem>>, %arg2: memref<300x400xf32, #tpu.memory_space<vmem>>, %arg3: memref<1x400xf32, #tpu.memory_space<vmem>>, %arg4: memref<400x400xf32, #tpu.memory_space<vmem>>, %arg5: memref<1x400xf32, #tpu.memory_space<vmem>>, %arg6: memref<1x400xf32, #tpu.memory_space<vmem>>, %arg7: memref<400x8xf32, #tpu.memory_space<vmem>>, %arg8: memref<8x400xf32, #tpu.memory_space<vmem>>, %arg9: memref<8x128xf32, #tpu.memory_space<vmem>>, %arg10: memref<8x128xf32, #tpu.memory_space<vmem>>) attributes {dimension_semantics = [#tpu.dimension_semantics<parallel>], iteration_bounds = array<i64: 1>, scalar_prefetch = 0 : i64, scratch_operands = 0 : i64, tpu.core_type = #tpu.core_type<tc>, window_params = [{transform_indices = @transform_0, window_bounds = array<i64: 8, 300>}, {pipeline_mode = #tpu.pipeline_mode<synchronous>, transform_indices = @transform_1, window_bounds = array<i64: 300, 400>}, {pipeline_mode = #tpu.pipeline_mode<synchronous>, transform_indices = @transform_2, window_bounds = array<i64: 1, 400>}, {pipeline_mode = #tpu.pipeline_mode<synchronous>, transform_indices = @transform_3, window_bounds = array<i64: 400, 400>}, {pipeline_mode = #tpu.pipeline_mode<synchronous>, transform_indices = @transform_4, window_bounds = array<i64: 1, 400>}, {pipeline_mode = #tpu.pipeline_mode<synchronous>, transform_indices = @transform_5, window_bounds = array<i64: 1, 400>}, {pipeline_mode = #tpu.pipeline_mode<synchronous>, transform_indices = @transform_6, window_bounds = array<i64: 400, 8>}, {pipeline_mode = #tpu.pipeline_mode<synchronous>, transform_indices = @transform_7, window_bounds = array<i64: 8, 400>}, {pipeline_mode = #tpu.pipeline_mode<synchronous>, transform_indices = @transform_8, window_bounds = array<i64: 8, 128>}, {transform_indices = @transform_9, window_bounds = array<i64: 8, 128>}]} {
    %c0 = arith.constant 0 : index
    %c0_0 = arith.constant 0 : index
    %0 = vector.load %arg1[%c0, %c0_0] : memref<8x300xf32, #tpu.memory_space<vmem>>, vector<8x300xf32>
    %c0_1 = arith.constant 0 : index
    %c0_2 = arith.constant 0 : index
    %1 = vector.load %arg2[%c0_1, %c0_2] : memref<300x400xf32, #tpu.memory_space<vmem>>, vector<300x400xf32>
    %cst = arith.constant dense<0.000000e+00> : vector<8x400xf32>
    %2 = tpu.matmul %0, %1, %cst {dimension_numbers = #tpu.dot_dimension_numbers<[1], [0], [0], [1], [0, 0, 1, 1], [], []>} : vector<8x300xf32>, vector<300x400xf32>, vector<8x400xf32> -> vector<8x400xf32>
    %c0_3 = arith.constant 0 : index
    %c0_4 = arith.constant 0 : index
    %3 = vector.load %arg3[%c0_3, %c0_4] : memref<1x400xf32, #tpu.memory_space<vmem>>, vector<1x400xf32>
    %4 = vector.broadcast %3 : vector<1x400xf32> to vector<8x400xf32>
    %5 = arith.addf %2, %4 : vector<8x400xf32>
    %c0_5 = arith.constant 0 : index
    %c0_6 = arith.constant 0 : index
    %6 = vector.load %arg7[%c0_5, %c0_6] : memref<400x8xf32, #tpu.memory_space<vmem>>, vector<400x8xf32>
    %c0_7 = arith.constant 0 : index
    %c0_8 = arith.constant 0 : index
    %7 = vector.load %arg8[%c0_7, %c0_8] : memref<8x400xf32, #tpu.memory_space<vmem>>, vector<8x400xf32>
    %cst_9 = arith.constant dense<0.000000e+00> : vector<8x8xf32>
    %8 = tpu.matmul %5, %6, %cst_9 {dimension_numbers = #tpu.dot_dimension_numbers<[1], [0], [0], [1], [0, 0, 1, 1], [], []>} : vector<8x400xf32>, vector<400x8xf32>, vector<8x8xf32> -> vector<8x8xf32>
    %cst_10 = arith.constant 2.000000e-02 : f32
    %9 = vector.broadcast %cst_10 : f32 to vector<8x8xf32>
    %10 = arith.mulf %8, %9 : vector<8x8xf32>
    %cst_11 = arith.constant dense<0.000000e+00> : vector<8x400xf32>
    %11 = tpu.matmul %10, %7, %cst_11 {dimension_numbers = #tpu.dot_dimension_numbers<[1], [0], [0], [1], [0, 0, 1, 1], [], []>} : vector<8x8xf32>, vector<8x400xf32>, vector<8x400xf32> -> vector<8x400xf32>
    %12 = arith.subf %5, %11 : vector<8x400xf32>
    %13 = arith.mulf %12, %12 : vector<8x400xf32>
    %cst_12 = arith.constant dense<0.000000e+00> : vector<8x8xf32>
    %14 = tpu.matmul %13, %6, %cst_12 {dimension_numbers = #tpu.dot_dimension_numbers<[1], [0], [0], [1], [0, 0, 1, 1], [], []>} : vector<8x400xf32>, vector<400x8xf32>, vector<8x8xf32> -> vector<8x8xf32>
    %cst_13 = arith.constant 2.000000e-02 : f32
    %15 = vector.broadcast %cst_13 : f32 to vector<8x8xf32>
    %16 = arith.mulf %14, %15 : vector<8x8xf32>
    %cst_14 = arith.constant dense<0.000000e+00> : vector<8x400xf32>
    %17 = tpu.matmul %16, %7, %cst_14 {dimension_numbers = #tpu.dot_dimension_numbers<[1], [0], [0], [1], [0, 0, 1, 1], [], []>} : vector<8x8xf32>, vector<8x400xf32>, vector<8x400xf32> -> vector<8x400xf32>
    %cst_15 = arith.constant 9.99999974E-6 : f32
    %18 = vector.broadcast %cst_15 : f32 to vector<8x400xf32>
    %19 = arith.addf %17, %18 : vector<8x400xf32>
    %20 = math.rsqrt %19 : vector<8x400xf32>
    %21 = arith.mulf %12, %20 : vector<8x400xf32>
    %cst_16 = arith.constant 0.000000e+00 : f32
    %22 = vector.broadcast %cst_16 : f32 to vector<8x400xf32>
    %23 = arith.maximumf %21, %22 : vector<8x400xf32>
    %c0_17 = arith.constant 0 : index
    %c0_18 = arith.constant 0 : index
    %24 = vector.load %arg4[%c0_17, %c0_18] : memref<400x400xf32, #tpu.memory_space<vmem>>, vector<400x400xf32>
    %cst_19 = arith.constant dense<0.000000e+00> : vector<8x400xf32>
    %25 = tpu.matmul %23, %24, %cst_19 {dimension_numbers = #tpu.dot_dimension_numbers<[1], [0], [0], [1], [0, 0, 1, 1], [], []>} : vector<8x400xf32>, vector<400x400xf32>, vector<8x400xf32> -> vector<8x400xf32>
    %c0_20 = arith.constant 0 : index
    %c0_21 = arith.constant 0 : index
    %26 = vector.load %arg5[%c0_20, %c0_21] : memref<1x400xf32, #tpu.memory_space<vmem>>, vector<1x400xf32>
    %27 = vector.broadcast %26 : vector<1x400xf32> to vector<8x400xf32>
    %28 = arith.addf %25, %27 : vector<8x400xf32>
    %c0_22 = arith.constant 0 : index
    %c0_23 = arith.constant 0 : index
    %29 = vector.load %arg6[%c0_22, %c0_23] : memref<1x400xf32, #tpu.memory_space<vmem>>, vector<1x400xf32>
    %30 = vector.broadcast %29 : vector<1x400xf32> to vector<8x400xf32>
    %31 = arith.subf %28, %30 : vector<8x400xf32>
    %32 = arith.mulf %31, %31 : vector<8x400xf32>
    %cst_24 = arith.constant dense<0.000000e+00> : vector<8x8xf32>
    %33 = tpu.matmul %32, %6, %cst_24 {dimension_numbers = #tpu.dot_dimension_numbers<[1], [0], [0], [1], [0, 0, 1, 1], [], []>} : vector<8x400xf32>, vector<400x8xf32>, vector<8x8xf32> -> vector<8x8xf32>
    %cst_25 = arith.constant 1.000000e+00 : f32
    %34 = vector.broadcast %cst_25 : f32 to vector<8x8xf32>
    %35 = arith.addf %33, %34 : vector<8x8xf32>
    %cst_26 = arith.constant 9.99999974E-6 : f32
    %36 = vector.broadcast %cst_26 : f32 to vector<8x8xf32>
    %37 = arith.addf %33, %36 : vector<8x8xf32>
    %38 = arith.divf %35, %37 : vector<8x8xf32>
    %39 = math.log %38 : vector<8x8xf32>
    %c0_27 = arith.constant 0 : index
    %c0_28 = arith.constant 0 : index
    %40 = vector.load %arg9[%c0_27, %c0_28] : memref<8x128xf32, #tpu.memory_space<vmem>>, vector<8x128xf32>
    %cst_29 = arith.constant dense<0.000000e+00> : vector<8x128xf32>
    %41 = tpu.matmul %39, %40, %cst_29 {dimension_numbers = #tpu.dot_dimension_numbers<[1], [0], [0], [1], [0, 0, 1, 1], [], []>} : vector<8x8xf32>, vector<8x128xf32>, vector<8x128xf32> -> vector<8x128xf32>
    %42 = math.tanh %41 : vector<8x128xf32>
    %c0_30 = arith.constant 0 : index
    %c0_31 = arith.constant 0 : index
    %43 = vector.load %arg10[%c0_30, %c0_31] : memref<8x128xf32, #tpu.memory_space<vmem>>, vector<8x128xf32>
    tpu.vector_store %arg10[%c0_30, %c0_31], %42 {strides = array<i32>} : memref<8x128xf32, #tpu.memory_space<vmem>>, vector<8x128xf32>,
    return
  }
  func.func @transform_0(%arg0: i32) -> (i32, i32) {
    %c0_i32 = arith.constant 0 : i32
    %c0_i32_0 = arith.constant 0 : i32
    return %arg0, %c0_i32 : i32, i32
  }
  func.func @transform_1(%arg0: i32) -> (i32, i32) {
    %c0_i32 = arith.constant 0 : i32
    %c0_i32_0 = arith.constant 0 : i32
    %c0_i32_1 = arith.constant 0 : i32
    return %c0_i32, %c0_i32_0 : i32, i32
  }
  func.func @transform_2(%arg0: i32) -> (i32, i32) {
    %c0_i32 = arith.constant 0 : i32
    %c0_i32_0 = arith.constant 0 : i32
    %c0_i32_1 = arith.constant 0 : i32
    return %c0_i32, %c0_i32_0 : i32, i32
  }
  func.func @transform_3(%arg0: i32) -> (i32, i32) {
    %c0_i32 = arith.constant 0 : i32
    %c0_i32_0 = arith.constant 0 : i32
    %c0_i32_1 = arith.constant 0 : i32
    return %c0_i32, %c0_i32_0 : i32, i32
  }
  func.func @transform_4(%arg0: i32) -> (i32, i32) {
    %c0_i32 = arith.constant 0 : i32
    %c0_i32_0 = arith.constant 0 : i32
    %c0_i32_1 = arith.constant 0 : i32
    return %c0_i32, %c0_i32_0 : i32, i32
  }
  func.func @transform_5(%arg0: i32) -> (i32, i32) {
    %c0_i32 = arith.constant 0 : i32
    %c0_i32_0 = arith.constant 0 : i32
    %c0_i32_1 = arith.constant 0 : i32
    return %c0_i32, %c0_i32_0 : i32, i32
  }
  func.func @transform_6(%arg0: i32) -> (i32, i32) {
    %c0_i32 = arith.constant 0 : i32
    %c0_i32_0 = arith.constant 0 : i32
    %c0_i32_1 = arith.constant 0 : i32
    return %c0_i32, %c0_i32_0 : i32, i32
  }
  func.func @transform_7(%arg0: i32) -> (i32, i32) {
    %c0_i32 = arith.constant 0 : i32
    %c0_i32_0 = arith.constant 0 : i32
    %c0_i32_1 = arith.constant 0 : i32
    return %c0_i32, %c0_i32_0 : i32, i32
  }
  func.func @transform_8(%arg0: i32) -> (i32, i32) {
    %c0_i32 = arith.constant 0 : i32
    %c0_i32_0 = arith.constant 0 : i32
    %c0_i32_1 = arith.constant 0 : i32
    return %c0_i32, %c0_i32_0 : i32, i32
  }
  func.func @transform_9(%arg0: i32) -> (i32, i32) {
    %c0_i32 = arith.constant 0 : i32
    %c0_i32_0 = arith.constant 0 : i32
    return %arg0, %c0_i32 : i32, i32
  }
}

</mosaic_0001>

<llo_original>
// kernel: pwnet_forward.1
$region0: #{pwnet_forward.1}
  #allocation0 [shape = 'u32[]', space=smem, size = 0x4, offset = 0x4, fixed_abs, tag = 'smem constant byte address 0x4 - core index']
  #allocation1 [shape = 'u32[144,128]{1,0:T(1,128)}', space=vmem, size = 0x12000, scoped, tag = 'internal scratch']
  %s0 = inlined_call_operand.vmem [shape: f32[8,300], index: 0, kind: input, shape index: {}]
  %s1 = inlined_call_operand.vmem [shape: f32[300,400], index: 1, kind: input, shape index: {}]
  %s2 = inlined_call_operand.vmem [shape: f32[1,400], index: 2, kind: input, shape index: {}]
  %s3 = inlined_call_operand.vmem [shape: f32[400,400], index: 3, kind: input, shape index: {}]
  %s4 = inlined_call_operand.vmem [shape: f32[1,400], index: 4, kind: input, shape index: {}]
  %s5 = inlined_call_operand.vmem [shape: f32[1,400], index: 5, kind: input, shape index: {}]
  %s6 = inlined_call_operand.vmem [shape: f32[400,8], index: 6, kind: input, shape index: {}]
  %s7 = inlined_call_operand.vmem [shape: f32[8,400], index: 7, kind: input, shape index: {}]
  %s8 = inlined_call_operand.vmem [shape: f32[8,128], index: 8, kind: input, shape index: {}]
  %s9 = inlined_call_operand.vmem [shape: f32[8,128], index: 9, kind: output, shape index: {}]
  %s10 = sld [smem:[#allocation0]]
  $region46: #{pwnet_forward.1} parent=0
    _
  %s12 = ssub.s32 1, %s10
  %s13 = scalar_select 0, %s12, %s10
  // Predicated region
  $region2: #{pwnet_forward.1} parent=0 // pred_check
    _
  $region3: #{pwnet_forward.1} parent=0 // pred_check_branch
    %15 = sbr.rel (0) target = $region5
  $region4: #{pwnet_forward.1} parent=0 // pred_region
    _
  $region5: #{pwnet_forward.1} parent=0 // pred_fallthru
    _
  // Predicated region
  $region6: #{pwnet_forward.1} parent=0 // pred_check
    _
  $region7: #{pwnet_forward.1} parent=0 // pred_check_branch
    %17 = sbr.rel (0) target = $region9
  $region8: #{pwnet_forward.1} parent=0 // pred_region
    _
  $region9: #{pwnet_forward.1} parent=0 // pred_fallthru
    _
  // Predicated region
  $region10: #{pwnet_forward.1} parent=0 // pred_check
    _
  $region11: #{pwnet_forward.1} parent=0 // pred_check_branch
    %19 = sbr.rel (0) target = $region13
  $region12: #{pwnet_forward.1} parent=0 // pred_region
    _
  $region13: #{pwnet_forward.1} parent=0 // pred_fallthru
    _
  // Predicated region
  $region14: #{pwnet_forward.1} parent=0 // pred_check
    _
  $region15: #{pwnet_forward.1} parent=0 // pred_check_branch
    %21 = sbr.rel (0) target = $region17
  $region16: #{pwnet_forward.1} parent=0 // pred_region
    _
  $region17: #{pwnet_forward.1} parent=0 // pred_fallthru
    _
  // Predicated region
  $region18: #{pwnet_forward.1} parent=0 // pred_check
    _
  $region19: #{pwnet_forward.1} parent=0 // pred_check_branch
    %23 = sbr.rel (0) target = $region21
  $region20: #{pwnet_forward.1} parent=0 // pred_region
    _
  $region21: #{pwnet_forward.1} parent=0 // pred_fallthru
    _
  // Predicated region
  $region22: #{pwnet_forward.1} parent=0 // pred_check
    _
  $region23: #{pwnet_forward.1} parent=0 // pred_check_branch
    %25 = sbr.rel (0) target = $region25
  $region24: #{pwnet_forward.1} parent=0 // pred_region
    _
  $region25: #{pwnet_forward.1} parent=0 // pred_fallthru
    _
  // Predicated region
  $region26: #{pwnet_forward.1} parent=0 // pred_check
    _
  $region27: #{pwnet_forward.1} parent=0 // pred_check_branch
    %27 = sbr.rel (0) target = $region29
  $region28: #{pwnet_forward.1} parent=0 // pred_region
    _
  $region29: #{pwnet_forward.1} parent=0 // pred_fallthru
    _
  // Predicated region
  $region30: #{pwnet_forward.1} parent=0 // pred_check
    _
  $region31: #{pwnet_forward.1} parent=0 // pred_check_branch
    %29 = sbr.rel (0) target = $region33
  $region32: #{pwnet_forward.1} parent=0 // pred_region
    _
  $region33: #{pwnet_forward.1} parent=0 // pred_fallthru
    _
  // Predicated region
  $region34: #{pwnet_forward.1} parent=0 // pred_check
    _
  $region35: #{pwnet_forward.1} parent=0 // pred_check_branch
    %31 = sbr.rel (0) target = $region37
  $region36: #{pwnet_forward.1} parent=0 // pred_region
    _
  $region37: #{pwnet_forward.1} parent=0 // pred_fallthru
    _
  %v32 = vld [vmem:[%s0] sm:$0xff]
  %v33 = vld [vmem:[%s0 + $0x8] sm:$0xff]
  %v34 = vld [vmem:[%s0 + $0x10] sm:$0xff]
  %v35 = vld [vmem:[%s1] sm:$0xff]
  %v36 = vld [vmem:[%s1 + $0x8] sm:$0xff]
  %v37 = vld [vmem:[%s1 + $0x10] sm:$0xff]
  %v38 = vld [vmem:[%s1 + $0x18] sm:$0xff]
  %v39 = vld [vmem:[%s1 + $0x20] sm:$0xff]
  %v40 = vld [vmem:[%s1 + $0x28] sm:$0xff]
  %v41 = vld [vmem:[%s1 + $0x30] sm:$0xff]
  %v42 = vld [vmem:[%s1 + $0x38] sm:$0xff]
  %v43 = vld [vmem:[%s1 + $0x40] sm:$0xff]
  %v44 = vld [vmem:[%s1 + $0x48] sm:$0xff]
  %v45 = vld [vmem:[%s1 + $0x50] sm:$0xff]
  %v46 = vld [vmem:[%s1 + $0x58] sm:$0xff]
  %v47 = vld [vmem:[%s1 + $0x60] sm:$0xff]
  %v48 = vld [vmem:[%s1 + $0x68] sm:$0xff]
  %v49 = vld [vmem:[%s1 + $0x70] sm:$0xff]
  %v50 = vld [vmem:[%s1 + $0x78] sm:$0xff]
  %v51 = vld [vmem:[%s1 + $0x80] sm:$0xff]
  %v52 = vld [vmem:[%s1 + $0x88] sm:$0xff]
  %v53 = vld [vmem:[%s1 + $0x90] sm:$0xff]
  %v54 = vld [vmem:[%s1 + $0x98] sm:$0xff]
  %v55 = vld [vmem:[%s1 + $0xa0] sm:$0xff]
  %v56 = vld [vmem:[%s1 + $0xa8] sm:$0xff]
  %v57 = vld [vmem:[%s1 + $0xb0] sm:$0xff]
  %v58 = vld [vmem:[%s1 + $0xb8] sm:$0xff]
  %v59 = vld [vmem:[%s1 + $0xc0] sm:$0xff]
  %v60 = vld [vmem:[%s1 + $0xc8] sm:$0xff]
  %v61 = vld [vmem:[%s1 + $0xd0] sm:$0xff]
  %v62 = vld [vmem:[%s1 + $0xd8] sm:$0xff]
  %v63 = vld [vmem:[%s1 + $0xe0] sm:$0xff]
  %v64 = vld [vmem:[%s1 + $0xe8] sm:$0xff]
  %v65 = vld [vmem:[%s1 + $0xf0] sm:$0xff]
  %v66 = vld [vmem:[%s1 + $0xf8] sm:$0xff]
  %v67 = vld [vmem:[%s1 + $0x100] sm:$0xff]
  %v68 = vld [vmem:[%s1 + $0x108] sm:$0xff]
  %v69 = vld [vmem:[%s1 + $0x110] sm:$0xff]
  %v70 = vld [vmem:[%s1 + $0x118] sm:$0xff]
  %v71 = vld [vmem:[%s1 + $0x120] sm:$0xff]
  %v72 = vld [vmem:[%s1 + $0x128] sm:$0xff]
  %v73 = vld [vmem:[%s1 + $0x130] sm:$0xff]
  %v74 = vld [vmem:[%s1 + $0x138] sm:$0xff]
  %v75 = vld [vmem:[%s1 + $0x140] sm:$0xff]
  %v76 = vld [vmem:[%s1 + $0x148] sm:$0xff]
  %v77 = vld [vmem:[%s1 + $0x150] sm:$0xff]
  %v78 = vld [vmem:[%s1 + $0x158] sm:$0xff]
  %v79 = vld [vmem:[%s1 + $0x160] sm:$0xff]
  %v80 = vld [vmem:[%s1 + $0x168] sm:$0xff]
  %v81 = vld [vmem:[%s1 + $0x170] sm:$0xff]
  %v82 = vld [vmem:[%s1 + $0x178] sm:$0xff]
  %v83 = vld [vmem:[%s1 + $0x180] sm:$0xff]
  %v84 = vld [vmem:[%s1 + $0x188] sm:$0xff]
  %v85 = vld [vmem:[%s1 + $0x190] sm:$0xff]
  %v86 = vld [vmem:[%s1 + $0x198] sm:$0xff]
  %v87 = vld [vmem:[%s1 + $0x1a0] sm:$0xff]
  %v88 = vld [vmem:[%s1 + $0x1a8] sm:$0xff]
  %v89 = vld [vmem:[%s1 + $0x1b0] sm:$0xff]
  %v90 = vld [vmem:[%s1 + $0x1b8] sm:$0xff]
  %v91 = vld [vmem:[%s1 + $0x1c0] sm:$0xff]
  %v92 = vld [vmem:[%s1 + $0x1c8] sm:$0xff]
  %v93 = vld [vmem:[%s1 + $0x1d0] sm:$0xff]
  %v94 = vld [vmem:[%s1 + $0x1d8] sm:$0xff]
  %v95 = vld [vmem:[%s1 + $0x1e0] sm:$0xff]
  %v96 = vld [vmem:[%s1 + $0x1e8] sm:$0xff]
  %v97 = vld [vmem:[%s1 + $0x1f0] sm:$0xff]
  %v98 = vld [vmem:[%s1 + $0x1f8] sm:$0xff]
  %v99 = vld [vmem:[%s1 + $0x200] sm:$0xff]
  %v100 = vld [vmem:[%s1 + $0x208] sm:$0xff]
  %v101 = vld [vmem:[%s1 + $0x210] sm:$0xff]
  %v102 = vld [vmem:[%s1 + $0x218] sm:$0xff]
  %v103 = vld [vmem:[%s1 + $0x220] sm:$0xff]
  %v104 = vld [vmem:[%s1 + $0x228] sm:$0xff]
  %v105 = vld [vmem:[%s1 + $0x230] sm:$0xff]
  %v106 = vld [vmem:[%s1 + $0x238] sm:$0xff]
  %v107 = vld [vmem:[%s1 + $0x240] sm:$0xff]
  %v108 = vld [vmem:[%s1 + $0x248] sm:$0xff]
  %v109 = vld [vmem:[%s1 + $0x250] sm:$0xff]
  %v110 = vld [vmem:[%s1 + $0x258] sm:$0xff]
  %v111 = vld [vmem:[%s1 + $0x260] sm:$0xff]
  %v112 = vld [vmem:[%s1 + $0x268] sm:$0xff]
  %v113 = vld [vmem:[%s1 + $0x270] sm:$0xff]
  %v114 = vld [vmem:[%s1 + $0x278] sm:$0xff]
  %v115 = vld [vmem:[%s1 + $0x280] sm:$0xff]
  %v116 = vld [vmem:[%s1 + $0x288] sm:$0xff]
  %v117 = vld [vmem:[%s1 + $0x290] sm:$0xff]
  %v118 = vld [vmem:[%s1 + $0x298] sm:$0xff]
  %v119 = vld [vmem:[%s1 + $0x2a0] sm:$0xff]
  %v120 = vld [vmem:[%s1 + $0x2a8] sm:$0xff]
  %v121 = vld [vmem:[%s1 + $0x2b0] sm:$0xff]
  %v122 = vld [vmem:[%s1 + $0x2b8] sm:$0xff]
  %v123 = vld [vmem:[%s1 + $0x2c0] sm:$0xff]
  %v124 = vld [vmem:[%s1 + $0x2c8] sm:$0xff]
  %v125 = vld [vmem:[%s1 + $0x2d0] sm:$0xff]
  %v126 = vld [vmem:[%s1 + $0x2d8] sm:$0xff]
  %v127 = vld [vmem:[%s1 + $0x2e0] sm:$0xff]
  %v128 = vld [vmem:[%s1 + $0x2e8] sm:$0xff]
  %v129 = vld [vmem:[%s1 + $0x2f0] sm:$0xff]
  %v130 = vld [vmem:[%s1 + $0x2f8] sm:$0xff]
  %v131 = vld [vmem:[%s1 + $0x300] sm:$0xff]
  %v132 = vld [vmem:[%s1 + $0x308] sm:$0xff]
  %v133 = vld [vmem:[%s1 + $0x310] sm:$0xff]
  %v134 = vld [vmem:[%s1 + $0x318] sm:$0xff]
  %v135 = vld [vmem:[%s1 + $0x320] sm:$0xff]
  %v136 = vld [vmem:[%s1 + $0x328] sm:$0xff]
  %v137 = vld [vmem:[%s1 + $0x330] sm:$0xff]
  %v138 = vld [vmem:[%s1 + $0x338] sm:$0xff]
  %v139 = vld [vmem:[%s1 + $0x340] sm:$0xff]
  %v140 = vld [vmem:[%s1 + $0x348] sm:$0xff]
  %v141 = vld [vmem:[%s1 + $0x350] sm:$0xff]
  %v142 = vld [vmem:[%s1 + $0x358] sm:$0xff]
  %v143 = vld [vmem:[%s1 + $0x360] sm:$0xff]
  %v144 = vld [vmem:[%s1 + $0x368] sm:$0xff]
  %v145 = vld [vmem:[%s1 + $0x370] sm:$0xff]
  %v146 = vld [vmem:[%s1 + $0x378] sm:$0xff]
  %v147 = vld [vmem:[%s1 + $0x380] sm:$0xff]
  %v148 = vld [vmem:[%s1 + $0x388] sm:$0xff]
  %v149 = vld [vmem:[%s1 + $0x390] sm:$0xff]
  %v150 = vld [vmem:[%s1 + $0x398] sm:$0xff]
  %v151 = vld [vmem:[%s1 + $0x3a0] sm:$0xff]
  %v152 = vld [vmem:[%s1 + $0x3a8] sm:$0xff]
  %v153 = vld [vmem:[%s1 + $0x3b0] sm:$0xff]
  %v154 = vld [vmem:[%s1 + $0x3b8] sm:$0xff]
  %v155 = vld [vmem:[%s1 + $0x3c0] sm:$0xff]
  %v156 = vld [vmem:[%s1 + $0x3c8] sm:$0xff]
  %v157 = vld [vmem:[%s1 + $0x3d0] sm:$0xff]
  %v158 = vld [vmem:[%s1 + $0x3d8] sm:$0xff]
  %v159 = vld [vmem:[%s1 + $0x3e0] sm:$0xff]
  %v160 = vld [vmem:[%s1 + $0x3e8] sm:$0xff]
  %v161 = vld [vmem:[%s1 + $0x3f0] sm:$0xff]
  %v162 = vld [vmem:[%s1 + $0x3f8] sm:$0xff]
  %v163 = vld [vmem:[%s1 + $0x400] sm:$0xff]
  %v164 = vld [vmem:[%s1 + $0x408] sm:$0xff]
  %v165 = vld [vmem:[%s1 + $0x410] sm:$0xff]
  %v166 = vld [vmem:[%s1 + $0x418] sm:$0xff]
  %v167 = vld [vmem:[%s1 + $0x420] sm:$0xff]
  %v168 = vld [vmem:[%s1 + $0x428] sm:$0xff]
  %v169 = vld [vmem:[%s1 + $0x430] sm:$0xff]
  %v170 = vld [vmem:[%s1 + $0x438] sm:$0xff]
  %v171 = vld [vmem:[%s1 + $0x440] sm:$0xff]
  %v172 = vld [vmem:[%s1 + $0x448] sm:$0xff]
  %v173 = vld [vmem:[%s1 + $0x450] sm:$0xff]
  %v174 = vld [vmem:[%s1 + $0x458] sm:$0xff]
  %v175 = vld [vmem:[%s1 + $0x460] sm:$0xff]
  %v176 = vld [vmem:[%s1 + $0x468] sm:$0xff]
  %v177 = vld [vmem:[%s1 + $0x470] sm:$0xff]
  %v178 = vld [vmem:[%s1 + $0x478] sm:$0xff]
  %v179 = vld [vmem:[%s1 + $0x480] sm:$0xff]
  %v180 = vld [vmem:[%s1 + $0x488] sm:$0xff]
  %v181 = vld [vmem:[%s1 + $0x490] sm:$0xff]
  %v182 = vld [vmem:[%s1 + $0x498] sm:$0xff]
  %v183 = vld [vmem:[%s1 + $0x4a0] sm:$0xf]
  %v184 = vld [vmem:[%s1 + $0x4a8] sm:$0xf]
  %v185 = vld [vmem:[%s1 + $0x4b0] sm:$0xf]
  %v186 = vld [vmem:[%s1 + $0x4b8] sm:$0xf]
  %v187 = vld [vmem:[%s2] sm:$0xf]
  %v189 = vlaneseq
  %v190 = vshrl.u32 %v189, 7
  %v191 = vsub.s32 0, %v190
  %v192 = vrot.slane %v187, %v191
  %v193 = vlaneseq
  %v194 = vshrl.u32 %v193, 7
  %v195 = vsub.s32 1, %v194
  %v196 = vrot.slane %v187, %v195
  %v197 = vlaneseq
  %v198 = vshrl.u32 %v197, 7
  %v199 = vsub.s32 2, %v198
  %v200 = vrot.slane %v187, %v199
  %v201 = vlaneseq
  %v202 = vshrl.u32 %v201, 7
  %v203 = vsub.s32 3, %v202
  %v204 = vrot.slane %v187, %v203
  %vm209 = vcmask 359424
  %v211 = vsel %vm209, %v34, 0
  %vm213 = vcmask 1043456
  %v215 = vsel %vm213, %v183, 0
  %v218 = vsel %vm213, %v184, 0
  %v221 = vsel %vm213, %v185, 0
  %v224 = vsel %vm213, %v186, 0
  %226 = vmatprep.subr.mxu0 %v36
  %227 = vmatpush1.msra.mxu0 %v35
  %228 = vmatprep.subr.mxu0 %v40
  %229 = vmatpush1.msra.mxu0 %v39
  %230 = vmatprep.subr.mxu0 %v44
  %231 = vmatpush1.msra.mxu0 %v43
  %232 = vmatprep.subr.mxu0 %v48
  %233 = vmatpush1.msra.mxu0 %v47
  %234 = vmatprep.subr.mxu0 %v52
  %235 = vmatpush1.msra.mxu0 %v51
  %236 = vmatprep.subr.mxu0 %v56
  %237 = vmatpush1.msra.mxu0 %v55
  %238 = vmatprep.subr.mxu0 %v60
  %239 = vmatpush1.msra.mxu0 %v59
  %240 = vmatprep.subr.mxu0 %v64
  %241 = vmatpush1.msra.mxu0 %v63
  %242 = vmatprep.subr.mxu0 %v68
  %243 = vmatpush1.msra.mxu0 %v67
  %244 = vmatprep.subr.mxu0 %v72
  %245 = vmatpush1.msra.mxu0 %v71
  %246 = vmatprep.subr.mxu0 %v76
  %247 = vmatpush1.msra.mxu0 %v75
  %248 = vmatprep.subr.mxu0 %v80
  %249 = vmatpush1.msra.mxu0 %v79
  %250 = vmatprep.subr.mxu0 %v84
  %251 = vmatpush1.msra.mxu0 %v83
  %252 = vmatprep.subr.mxu0 %v88
  %253 = vmatpush1.msra.mxu0 %v87
  %254 = vmatprep.subr.mxu0 %v92
  %255 = vmatpush1.msra.mxu0 %v91
  %256 = vmatprep.subr.mxu0 %v96
  %257 = vmatpush1.msra.mxu0 %v95
  %258 = vmatprep.subr.mxu0 %v100
  %259 = vmatpush1.msra.mxu0 %v99
  %260 = vmatprep.subr.mxu0 %v104
  %261 = vmatpush1.msra.mxu0 %v103
  %262 = vmatprep.subr.mxu0 %v108
  %263 = vmatpush1.msra.mxu0 %v107
  %264 = vmatprep.subr.mxu0 %v112
  %265 = vmatpush1.msra.mxu0 %v111
  %266 = vmatprep.subr.mxu0 %v116
  %267 = vmatpush1.msra.mxu0 %v115
  %268 = vmatprep.subr.mxu0 %v120
  %269 = vmatpush1.msra.mxu0 %v119
  %270 = vmatprep.subr.mxu0 %v124
  %271 = vmatpush1.msra.mxu0 %v123
  %272 = vmatprep.subr.mxu0 %v128
  %273 = vmatpush1.msra.mxu0 %v127
  %274 = vmatprep.subr.mxu0 %v132
  %275 = vmatpush1.msra.mxu0 %v131
  %276 = vmatprep.subr.mxu0 %v136
  %277 = vmatpush1.msra.mxu0 %v135
  %278 = vmatprep.subr.mxu0 %v140
  %279 = vmatpush1.msra.mxu0 %v139
  %280 = vmatprep.subr.mxu0 %v144
  %281 = vmatpush1.msra.mxu0 %v143
  %282 = vmatprep.subr.mxu0 %v148
  %283 = vmatpush1.msra.mxu0 %v147
  %284 = vmatprep.subr.mxu0 %v152
  %285 = vmatpush1.msra.mxu0 %v151
  %286 = vmatprep.subr.mxu0 %v156
  %287 = vmatpush1.msra.mxu0 %v155
  %288 = vmatprep.subr.mxu0 %v160
  %289 = vmatpush1.msra.mxu0 %v159
  %290 = vmatprep.mubr.f32.mxu0 %v33
  %291 = vmatmul.mubr.f32.gmra.mrb[0].mxu0 %v32
  %v292 = vpop.f32.mrb[0].mxu0
  %v293 = vadd.f32 %v192, %v292
  %v294 = vpop.f32.mrb[0].mxu0
  %v295 = vadd.f32 %v196, %v294
  %296 = vdwg.mxu0
  %297 = vmatprep.subr.mxu0 %v164
  %298 = vmatpush1.msra.mxu0 %v163
  %299 = vmatprep.subr.mxu0 %v168
  %300 = vmatpush1.msra.mxu0 %v167
  %301 = vmatprep.subr.mxu0 %v172
  %302 = vmatpush1.msra.mxu0 %v171
  %303 = vmatprep.subr.mxu0 %v176
  %304 = vmatpush1.msra.mxu0 %v175
  %305 = vmatprep.subr.mxu0 %v180
  %306 = vmatpush1.msra.mxu0 %v179
  %307 = vmatprep.subr.mxu0 %v218
  %308 = vmatpush1.msra.mxu0 %v215
  %309 = vmatprep.subr.mxu0 0.0
  %310 = vmatpush1.msra.mxu0 0.0
  %311 = vmatprep.subr.mxu0 0.0
  %312 = vmatpush1.msra.mxu0 0.0
  %313 = vmatprep.subr.mxu0 0.0
  %314 = vmatpush1.msra.mxu0 0.0
  %315 = vmatprep.subr.mxu0 0.0
  %316 = vmatpush1.msra.mxu0 0.0
  %317 = vmatprep.subr.mxu0 0.0
  %318 = vmatpush1.msra.mxu0 0.0
  %319 = vmatprep.subr.mxu0 0.0
  %320 = vmatpush1.msra.mxu0 0.0
  %321 = vmatprep.subr.mxu0 0.0
  %322 = vmatpush1.msra.mxu0 0.0
  %323 = vmatprep.subr.mxu0 0.0
  %324 = vmatpush1.msra.mxu0 0.0
  %325 = vmatprep.subr.mxu0 0.0
  %326 = vmatpush1.msra.mxu0 0.0
  %327 = vmatprep.subr.mxu0 0.0
  %328 = vmatpush1.msra.mxu0 0.0
  %329 = vmatprep.subr.mxu0 0.0
  %330 = vmatpush1.msra.mxu0 0.0
  %331 = vmatprep.subr.mxu0 0.0
  %332 = vmatpush1.msra.mxu0 0.0
  %333 = vmatprep.subr.mxu0 0.0
  %334 = vmatpush1.msra.mxu0 0.0
  %335 = vmatprep.subr.mxu0 0.0
  %336 = vmatpush1.msra.mxu0 0.0
  %337 = vmatprep.subr.mxu0 0.0
  %338 = vmatpush1.msra.mxu0 0.0
  %339 = vmatprep.subr.mxu0 0.0
  %340 = vmatpush1.msra.mxu0 0.0
  %341 = vmatprep.subr.mxu0 0.0
  %342 = vmatpush1.msra.mxu0 0.0
  %343 = vmatprep.subr.mxu0 0.0
  %344 = vmatpush1.msra.mxu0 0.0
  %345 = vmatprep.subr.mxu0 0.0
  %346 = vmatpush1.msra.mxu0 0.0
  %347 = vmatprep.subr.mxu0 0.0
  %348 = vmatpush1.msra.mxu0 0.0
  %349 = vmatprep.subr.mxu0 0.0
  %350 = vmatpush1.msra.mxu0 0.0
  %351 = vmatprep.subr.mxu0 0.0
  %352 = vmatpush1.msra.mxu0 0.0
  %353 = vmatprep.subr.mxu0 0.0
  %354 = vmatpush1.msra.mxu0 0.0
  %355 = vmatprep.subr.mxu0 0.0
  %356 = vmatpush1.msra.mxu0 0.0
  %357 = vmatprep.subr.mxu0 0.0
  %358 = vmatpush1.msra.mxu0 0.0
  %359 = vmatprep.subr.mxu0 0.0
  %360 = vmatpush1.msra.mxu0 0.0
  %361 = vmatprep.mubr.f32.mxu0 0.0
  %362 = vmatmul.mubr.f32.gmra.mrb[0].mxu0 %v211
  %v363 = vpop.f32.mrb[0].mxu0
  %v364 = vadd.f32 %v293, %v363
  %v365 = vpop.f32.mrb[0].mxu0
  %v366 = vadd.f32 %v295, %v365
  %367 = vdwg.mxu0
  %368 = vmatprep.subr.mxu0 %v38
  %369 = vmatpush1.msra.mxu0 %v37
  %370 = vmatprep.subr.mxu0 %v42
  %371 = vmatpush1.msra.mxu0 %v41
  %372 = vmatprep.subr.mxu0 %v46
  %373 = vmatpush1.msra.mxu0 %v45
  %374 = vmatprep.subr.mxu0 %v50
  %375 = vmatpush1.msra.mxu0 %v49
  %376 = vmatprep.subr.mxu0 %v54
  %377 = vmatpush1.msra.mxu0 %v53
  %378 = vmatprep.subr.mxu0 %v58
  %379 = vmatpush1.msra.mxu0 %v57
  %380 = vmatprep.subr.mxu0 %v62
  %381 = vmatpush1.msra.mxu0 %v61
  %382 = vmatprep.subr.mxu0 %v66
  %383 = vmatpush1.msra.mxu0 %v65
  %384 = vmatprep.subr.mxu0 %v70
  %385 = vmatpush1.msra.mxu0 %v69
  %386 = vmatprep.subr.mxu0 %v74
  %387 = vmatpush1.msra.mxu0 %v73
  %388 = vmatprep.subr.mxu0 %v78
  %389 = vmatpush1.msra.mxu0 %v77
  %390 = vmatprep.subr.mxu0 %v82
  %391 = vmatpush1.msra.mxu0 %v81
  %392 = vmatprep.subr.mxu0 %v86
  %393 = vmatpush1.msra.mxu0 %v85
  %394 = vmatprep.subr.mxu0 %v90
  %395 = vmatpush1.msra.mxu0 %v89
  %396 = vmatprep.subr.mxu0 %v94
  %397 = vmatpush1.msra.mxu0 %v93
  %398 = vmatprep.subr.mxu0 %v98
  %399 = vmatpush1.msra.mxu0 %v97
  %400 = vmatprep.subr.mxu0 %v102
  %401 = vmatpush1.msra.mxu0 %v101
  %402 = vmatprep.subr.mxu0 %v106
  %403 = vmatpush1.msra.mxu0 %v105
  %404 = vmatprep.subr.mxu0 %v110
  %405 = vmatpush1.msra.mxu0 %v109
  %406 = vmatprep.subr.mxu0 %v114
  %407 = vmatpush1.msra.mxu0 %v113
  %408 = vmatprep.subr.mxu0 %v118
  %409 = vmatpush1.msra.mxu0 %v117
  %410 = vmatprep.subr.mxu0 %v122
  %411 = vmatpush1.msra.mxu0 %v121
  %412 = vmatprep.subr.mxu0 %v126
  %413 = vmatpush1.msra.mxu0 %v125
  %414 = vmatprep.subr.mxu0 %v130
  %415 = vmatpush1.msra.mxu0 %v129
  %416 = vmatprep.subr.mxu0 %v134
  %417 = vmatpush1.msra.mxu0 %v133
  %418 = vmatprep.subr.mxu0 %v138
  %419 = vmatpush1.msra.mxu0 %v137
  %420 = vmatprep.subr.mxu0 %v142
  %421 = vmatpush1.msra.mxu0 %v141
  %422 = vmatprep.subr.mxu0 %v146
  %423 = vmatpush1.msra.mxu0 %v145
  %424 = vmatprep.subr.mxu0 %v150
  %425 = vmatpush1.msra.mxu0 %v149
  %426 = vmatprep.subr.mxu0 %v154
  %427 = vmatpush1.msra.mxu0 %v153
  %428 = vmatprep.subr.mxu0 %v158
  %429 = vmatpush1.msra.mxu0 %v157
  %430 = vmatprep.subr.mxu0 %v162
  %431 = vmatpush1.msra.mxu0 %v161
  %432 = vmatprep.mubr.f32.mxu0 %v33
  %433 = vmatmul.mubr.f32.gmra.mrb[0].mxu0 %v32
  %v434 = vpop.f32.mrb[0].mxu0
  %v435 = vadd.f32 %v200, %v434
  %v436 = vpop.f32.mrb[0].mxu0
  %v437 = vadd.f32 %v204, %v436
  %438 = vdwg.mxu0
  %439 = vmatprep.subr.mxu0 %v166
  %440 = vmatpush1.msra.mxu0 %v165
  %441 = vmatprep.subr.mxu0 %v170
  %442 = vmatpush1.msra.mxu0 %v169
  %443 = vmatprep.subr.mxu0 %v174
  %444 = vmatpush1.msra.mxu0 %v173
  %445 = vmatprep.subr.mxu0 %v178
  %446 = vmatpush1.msra.mxu0 %v177
  %447 = vmatprep.subr.mxu0 %v182
  %448 = vmatpush1.msra.mxu0 %v181
  %449 = vmatprep.subr.mxu0 %v224
  %450 = vmatpush1.msra.mxu0 %v221
  %451 = vmatprep.subr.mxu0 0.0
  %452 = vmatpush1.msra.mxu0 0.0
  %453 = vmatprep.subr.mxu0 0.0
  %454 = vmatpush1.msra.mxu0 0.0
  %455 = vmatprep.subr.mxu0 0.0
  %456 = vmatpush1.msra.mxu0 0.0
  %457 = vmatprep.subr.mxu0 0.0
  %458 = vmatpush1.msra.mxu0 0.0
  %459 = vmatprep.subr.mxu0 0.0
  %460 = vmatpush1.msra.mxu0 0.0
  %461 = vmatprep.subr.mxu0 0.0
  %462 = vmatpush1.msra.mxu0 0.0
  %463 = vmatprep.subr.mxu0 0.0
  %464 = vmatpush1.msra.mxu0 0.0
  %465 = vmatprep.subr.mxu0 0.0
  %466 = vmatpush1.msra.mxu0 0.0
  %467 = vmatprep.subr.mxu0 0.0
  %468 = vmatpush1.msra.mxu0 0.0
  %469 = vmatprep.subr.mxu0 0.0
  %470 = vmatpush1.msra.mxu0 0.0
  %471 = vmatprep.subr.mxu0 0.0
  %472 = vmatpush1.msra.mxu0 0.0
  %473 = vmatprep.subr.mxu0 0.0
  %474 = vmatpush1.msra.mxu0 0.0
  %475 = vmatprep.subr.mxu0 0.0
  %476 = vmatpush1.msra.mxu0 0.0
  %477 = vmatprep.subr.mxu0 0.0
  %478 = vmatpush1.msra.mxu0 0.0
  %479 = vmatprep.subr.mxu0 0.0
  %480 = vmatpush1.msra.mxu0 0.0
  %481 = vmatprep.subr.mxu0 0.0
  %482 = vmatpush1.msra.mxu0 0.0
  %483 = vmatprep.subr.mxu0 0.0
  %484 = vmatpush1.msra.mxu0 0.0
  %485 = vmatprep.subr.mxu0 0.0
  %486 = vmatpush1.msra.mxu0 0.0
  %487 = vmatprep.subr.mxu0 0.0
  %488 = vmatpush1.msra.mxu0 0.0
  %489 = vmatprep.subr.mxu0 0.0
  %490 = vmatpush1.msra.mxu0 0.0
  %491 = vmatprep.subr.mxu0 0.0
  %492 = vmatpush1.msra.mxu0 0.0
  %493 = vmatprep.subr.mxu0 0.0
  %494 = vmatpush1.msra.mxu0 0.0
  %495 = vmatprep.subr.mxu0 0.0
  %496 = vmatpush1.msra.mxu0 0.0
  %497 = vmatprep.subr.mxu0 0.0
  %498 = vmatpush1.msra.mxu0 0.0
  %499 = vmatprep.subr.mxu0 0.0
  %500 = vmatpush1.msra.mxu0 0.0
  %501 = vmatprep.subr.mxu0 0.0
  %502 = vmatpush1.msra.mxu0 0.0
  %503 = vmatprep.mubr.f32.mxu0 0.0
  %504 = vmatmul.mubr.f32.gmra.mrb[0].mxu0 %v211
  %v505 = vpop.f32.mrb[0].mxu0
  %v506 = vadd.f32 %v435, %v505
  %v507 = vpop.f32.mrb[0].mxu0
  %v508 = vadd.f32 %v437, %v507
  %509 = vdwg.mxu0
  %v510 = vld [vmem:[%s6] sm:$0xff]
  %v511 = vld [vmem:[%s6 + $0x8] sm:$0xff]
  %v512 = vld [vmem:[%s6 + $0x10] sm:$0xff]
  %v513 = vld [vmem:[%s6 + $0x18] sm:$0xff]
  %v514 = vld [vmem:[%s6 + $0x20] sm:$0xff]
  %v515 = vld [vmem:[%s6 + $0x28] sm:$0xff]
  %v516 = vld [vmem:[%s6 + $0x30] sm:$0xff]
  %v517 = vld [vmem:[%s6 + $0x38] sm:$0xff]
  %v518 = vld [vmem:[%s6 + $0x40] sm:$0xff]
  %v519 = vld [vmem:[%s6 + $0x48] sm:$0xff]
  %v520 = vld [vmem:[%s6 + $0x50] sm:$0xff]
  %v521 = vld [vmem:[%s6 + $0x58] sm:$0xff]
  %v522 = vld [vmem:[%s6 + $0x60] sm:$0xff]
  %v523 = vld [vmem:[%s6 + $0x68] sm:$0xff]
  %v524 = vld [vmem:[%s6 + $0x70] sm:$0xff]
  %v525 = vld [vmem:[%s6 + $0x78] sm:$0xff]
  %v526 = vld [vmem:[%s6 + $0x80] sm:$0xff]
  %v527 = vld [vmem:[%s6 + $0x88] sm:$0xff]
  %v528 = vld [vmem:[%s6 + $0x90] sm:$0xff]
  %v529 = vld [vmem:[%s6 + $0x98] sm:$0xff]
  %v530 = vld [vmem:[%s6 + $0xa0] sm:$0xff]
  %v531 = vld [vmem:[%s6 + $0xa8] sm:$0xff]
  %v532 = vld [vmem:[%s6 + $0xb0] sm:$0xff]
  %v533 = vld [vmem:[%s6 + $0xb8] sm:$0xff]
  %v534 = vld [vmem:[%s6 + $0xc0] sm:$0xff]
  %v535 = vld [vmem:[%s6 + $0xc8] sm:$0xff]
  %v536 = vld [vmem:[%s6 + $0xd0] sm:$0xff]
  %v537 = vld [vmem:[%s6 + $0xd8] sm:$0xff]
  %v538 = vld [vmem:[%s6 + $0xe0] sm:$0xff]
  %v539 = vld [vmem:[%s6 + $0xe8] sm:$0xff]
  %v540 = vld [vmem:[%s6 + $0xf0] sm:$0xff]
  %v541 = vld [vmem:[%s6 + $0xf8] sm:$0xff]
  %v542 = vld [vmem:[%s6 + $0x100] sm:$0xff]
  %v543 = vld [vmem:[%s6 + $0x108] sm:$0xff]
  %v544 = vld [vmem:[%s6 + $0x110] sm:$0xff]
  %v545 = vld [vmem:[%s6 + $0x118] sm:$0xff]
  %v546 = vld [vmem:[%s6 + $0x120] sm:$0xff]
  %v547 = vld [vmem:[%s6 + $0x128] sm:$0xff]
  %v548 = vld [vmem:[%s6 + $0x130] sm:$0xff]
  %v549 = vld [vmem:[%s6 + $0x138] sm:$0xff]
  %v550 = vld [vmem:[%s6 + $0x140] sm:$0xff]
  %v551 = vld [vmem:[%s6 + $0x148] sm:$0xff]
  %v552 = vld [vmem:[%s6 + $0x150] sm:$0xff]
  %v553 = vld [vmem:[%s6 + $0x158] sm:$0xff]
  %v554 = vld [vmem:[%s6 + $0x160] sm:$0xff]
  %v555 = vld [vmem:[%s6 + $0x168] sm:$0xff]
  %v556 = vld [vmem:[%s6 + $0x170] sm:$0xff]
  %v557 = vld [vmem:[%s6 + $0x178] sm:$0xff]
  %v558 = vld [vmem:[%s6 + $0x180] sm:$0xff]
  %v559 = vld [vmem:[%s6 + $0x188] sm:$0xff]
  %v560 = vld [vmem:[%s7] sm:$0xff]
  %v561 = vld [vmem:[%s7 + $0x8] sm:$0xff]
  %v562 = vld [vmem:[%s7 + $0x10] sm:$0xff]
  %v563 = vld [vmem:[%s7 + $0x18] sm:$0xff]
  %vm564 = vcmask 130048
  %v566 = vsel %vm564, %v508, 0
  %568 = vmatprep.subr.mxu0 0.0
  %569 = vmatpush1.msra.mxu0 %v510
  %570 = vmatprep.subr.mxu0 0.0
  %571 = vmatpush1.msra.mxu0 %v511
  %572 = vmatprep.subr.mxu0 0.0
  %573 = vmatpush1.msra.mxu0 %v512
  %574 = vmatprep.subr.mxu0 0.0
  %575 = vmatpush1.msra.mxu0 %v513
  %576 = vmatprep.subr.mxu0 0.0
  %577 = vmatpush1.msra.mxu0 %v514
  %578 = vmatprep.subr.mxu0 0.0
  %579 = vmatpush1.msra.mxu0 %v515
  %580 = vmatprep.subr.mxu0 0.0
  %581 = vmatpush1.msra.mxu0 %v516
  %582 = vmatprep.subr.mxu0 0.0
  %583 = vmatpush1.msra.mxu0 %v517
  %584 = vmatprep.subr.mxu0 0.0
  %585 = vmatpush1.msra.mxu0 %v518
  %586 = vmatprep.subr.mxu0 0.0
  %587 = vmatpush1.msra.mxu0 %v519
  %588 = vmatprep.subr.mxu0 0.0
  %589 = vmatpush1.msra.mxu0 %v520
  %590 = vmatprep.subr.mxu0 0.0
  %591 = vmatpush1.msra.mxu0 %v521
  %592 = vmatprep.subr.mxu0 0.0
  %593 = vmatpush1.msra.mxu0 %v522
  %594 = vmatprep.subr.mxu0 0.0
  %595 = vmatpush1.msra.mxu0 %v523
  %596 = vmatprep.subr.mxu0 0.0
  %597 = vmatpush1.msra.mxu0 %v524
  %598 = vmatprep.subr.mxu0 0.0
  %599 = vmatpush1.msra.mxu0 %v525
  %600 = vmatprep.subr.mxu0 0.0
  %601 = vmatpush1.msra.mxu0 %v526
  %602 = vmatprep.subr.mxu0 0.0
  %603 = vmatpush1.msra.mxu0 %v527
  %604 = vmatprep.subr.mxu0 0.0
  %605 = vmatpush1.msra.mxu0 %v528
  %606 = vmatprep.subr.mxu0 0.0
  %607 = vmatpush1.msra.mxu0 %v529
  %608 = vmatprep.subr.mxu0 0.0
  %609 = vmatpush1.msra.mxu0 %v530
  %610 = vmatprep.subr.mxu0 0.0
  %611 = vmatpush1.msra.mxu0 %v531
  %612 = vmatprep.subr.mxu0 0.0
  %613 = vmatpush1.msra.mxu0 %v532
  %614 = vmatprep.subr.mxu0 0.0
  %615 = vmatpush1.msra.mxu0 %v533
  %616 = vmatprep.subr.mxu0 0.0
  %617 = vmatpush1.msra.mxu0 %v534
  %618 = vmatprep.subr.mxu0 0.0
  %619 = vmatpush1.msra.mxu0 %v535
  %620 = vmatprep.subr.mxu0 0.0
  %621 = vmatpush1.msra.mxu0 %v536
  %622 = vmatprep.subr.mxu0 0.0
  %623 = vmatpush1.msra.mxu0 %v537
  %624 = vmatprep.subr.mxu0 0.0
  %625 = vmatpush1.msra.mxu0 %v538
  %626 = vmatprep.subr.mxu0 0.0
  %627 = vmatpush1.msra.mxu0 %v539
  %628 = vmatprep.subr.mxu0 0.0
  %629 = vmatpush1.msra.mxu0 %v540
  %630 = vmatprep.subr.mxu0 0.0
  %631 = vmatpush1.msra.mxu0 %v541
  %632 = vmatprep.mubr.f32.mxu0 %v366
  %633 = vmatmul.mubr.f32.gmra.mrb[0].mxu0 %v364
  %v634 = vpop.f32.mrb[0].mxu0
  %v635 = vadd.f32 0.0, %v634
  %v636 = vpop.f32.mrb[0].mxu0
  %637 = vdwg.mxu0
  %638 = vmatprep.subr.mxu0 0.0
  %639 = vmatpush1.msra.mxu0 %v542
  %640 = vmatprep.subr.mxu0 0.0
  %641 = vmatpush1.msra.mxu0 %v543
  %642 = vmatprep.subr.mxu0 0.0
  %643 = vmatpush1.msra.mxu0 %v544
  %644 = vmatprep.subr.mxu0 0.0
  %645 = vmatpush1.msra.mxu0 %v545
  %646 = vmatprep.subr.mxu0 0.0
  %647 = vmatpush1.msra.mxu0 %v546
  %648 = vmatprep.subr.mxu0 0.0
  %649 = vmatpush1.msra.mxu0 %v547
  %650 = vmatprep.subr.mxu0 0.0
  %651 = vmatpush1.msra.mxu0 %v548
  %652 = vmatprep.subr.mxu0 0.0
  %653 = vmatpush1.msra.mxu0 %v549
  %654 = vmatprep.subr.mxu0 0.0
  %655 = vmatpush1.msra.mxu0 %v550
  %656 = vmatprep.subr.mxu0 0.0
  %657 = vmatpush1.msra.mxu0 %v551
  %658 = vmatprep.subr.mxu0 0.0
  %659 = vmatpush1.msra.mxu0 %v552
  %660 = vmatprep.subr.mxu0 0.0
  %661 = vmatpush1.msra.mxu0 %v553
  %662 = vmatprep.subr.mxu0 0.0
  %663 = vmatpush1.msra.mxu0 %v554
  %664 = vmatprep.subr.mxu0 0.0
  %665 = vmatpush1.msra.mxu0 %v555
  %666 = vmatprep.subr.mxu0 0.0
  %667 = vmatpush1.msra.mxu0 %v556
  %668 = vmatprep.subr.mxu0 0.0
  %669 = vmatpush1.msra.mxu0 %v557
  %670 = vmatprep.subr.mxu0 0.0
  %671 = vmatpush1.msra.mxu0 %v558
  %672 = vmatprep.subr.mxu0 0.0
  %673 = vmatpush1.msra.mxu0 %v559
  %674 = vmatprep.subr.mxu0 0.0
  %675 = vmatpush1.msra.mxu0 0.0
  %676 = vmatprep.subr.mxu0 0.0
  %677 = vmatpush1.msra.mxu0 0.0
  %678 = vmatprep.subr.mxu0 0.0
  %679 = vmatpush1.msra.mxu0 0.0
  %680 = vmatprep.subr.mxu0 0.0
  %681 = vmatpush1.msra.mxu0 0.0
  %682 = vmatprep.subr.mxu0 0.0
  %683 = vmatpush1.msra.mxu0 0.0
  %684 = vmatprep.subr.mxu0 0.0
  %685 = vmatpush1.msra.mxu0 0.0
  %686 = vmatprep.subr.mxu0 0.0
  %687 = vmatpush1.msra.mxu0 0.0
  %688 = vmatprep.subr.mxu0 0.0
  %689 = vmatpush1.msra.mxu0 0.0
  %690 = vmatprep.subr.mxu0 0.0
  %691 = vmatpush1.msra.mxu0 0.0
  %692 = vmatprep.subr.mxu0 0.0
  %693 = vmatpush1.msra.mxu0 0.0
  %694 = vmatprep.subr.mxu0 0.0
  %695 = vmatpush1.msra.mxu0 0.0
  %696 = vmatprep.subr.mxu0 0.0
  %697 = vmatpush1.msra.mxu0 0.0
  %698 = vmatprep.subr.mxu0 0.0
  %699 = vmatpush1.msra.mxu0 0.0
  %700 = vmatprep.subr.mxu0 0.0
  %701 = vmatpush1.msra.mxu0 0.0
  %702 = vmatprep.mubr.f32.mxu0 %v566
  %703 = vmatmul.mubr.f32.gmra.mrb[0].mxu0 %v506
  %v704 = vpop.f32.mrb[0].mxu0
  %v705 = vadd.f32 %v635, %v704
  %v706 = vpop.f32.mrb[0].mxu0
  %707 = vdwg.mxu0
  %v708 = vmul.f32 %v705, 0.02
  %vm709 = vcmask 64512
  %v711 = vsel %vm709, %v708, 0
  %713 = vmatprep.subr.mxu0 %v561
  %714 = vmatpush1.msra.mxu0 %v560
  %715 = vmatprep.subr.mxu0 0.0
  %716 = vmatpush1.msra.mxu0 0.0
  %717 = vmatprep.subr.mxu0 0.0
  %718 = vmatpush1.msra.mxu0 0.0
  %719 = vmatprep.subr.mxu0 0.0
  %720 = vmatpush1.msra.mxu0 0.0
  %721 = vmatprep.subr.mxu0 0.0
  %722 = vmatpush1.msra.mxu0 0.0
  %723 = vmatprep.subr.mxu0 0.0
  %724 = vmatpush1.msra.mxu0 0.0
  %725 = vmatprep.subr.mxu0 0.0
  %726 = vmatpush1.msra.mxu0 0.0
  %727 = vmatprep.subr.mxu0 0.0
  %728 = vmatpush1.msra.mxu0 0.0
  %729 = vmatprep.subr.mxu0 0.0
  %730 = vmatpush1.msra.mxu0 0.0
  %731 = vmatprep.subr.mxu0 0.0
  %732 = vmatpush1.msra.mxu0 0.0
  %733 = vmatprep.subr.mxu0 0.0
  %734 = vmatpush1.msra.mxu0 0.0
  %735 = vmatprep.subr.mxu0 0.0
  %736 = vmatpush1.msra.mxu0 0.0
  %737 = vmatprep.subr.mxu0 0.0
  %738 = vmatpush1.msra.mxu0 0.0
  %739 = vmatprep.subr.mxu0 0.0
  %740 = vmatpush1.msra.mxu0 0.0
  %741 = vmatprep.subr.mxu0 0.0
  %742 = vmatpush1.msra.mxu0 0.0
  %743 = vmatprep.subr.mxu0 0.0
  %744 = vmatpush1.msra.mxu0 0.0
  %745 = vmatprep.subr.mxu0 0.0
  %746 = vmatpush1.msra.mxu0 0.0
  %747 = vmatprep.subr.mxu0 0.0
  %748 = vmatpush1.msra.mxu0 0.0
  %749 = vmatprep.subr.mxu0 0.0
  %750 = vmatpush1.msra.mxu0 0.0
  %751 = vmatprep.subr.mxu0 0.0
  %752 = vmatpush1.msra.mxu0 0.0
  %753 = vmatprep.subr.mxu0 0.0
  %754 = vmatpush1.msra.mxu0 0.0
  %755 = vmatprep.subr.mxu0 0.0
  %756 = vmatpush1.msra.mxu0 0.0
  %757 = vmatprep.subr.mxu0 0.0
  %758 = vmatpush1.msra.mxu0 0.0
  %759 = vmatprep.subr.mxu0 0.0
  %760 = vmatpush1.msra.mxu0 0.0
  %761 = vmatprep.subr.mxu0 0.0
  %762 = vmatpush1.msra.mxu0 0.0
  %763 = vmatprep.subr.mxu0 0.0
  %764 = vmatpush1.msra.mxu0 0.0
  %765 = vmatprep.subr.mxu0 0.0
  %766 = vmatpush1.msra.mxu0 0.0
  %767 = vmatprep.subr.mxu0 0.0
  %768 = vmatpush1.msra.mxu0 0.0
  %769 = vmatprep.subr.mxu0 0.0
  %770 = vmatpush1.msra.mxu0 0.0
  %771 = vmatprep.subr.mxu0 0.0
  %772 = vmatpush1.msra.mxu0 0.0
  %773 = vmatprep.subr.mxu0 0.0
  %774 = vmatpush1.msra.mxu0 0.0
  %775 = vmatprep.subr.mxu0 0.0
  %776 = vmatpush1.msra.mxu0 0.0
  %777 = vmatprep.mubr.f32.mxu0 0.0
  %778 = vmatmul.mubr.f32.gmra.mrb[0].mxu0 %v711
  %v779 = vpop.f32.mrb[0].mxu0
  %v780 = vadd.f32 0.0, %v779
  %v781 = vpop.f32.mrb[0].mxu0
  %v782 = vadd.f32 0.0, %v781
  %783 = vdwg.mxu0
  %784 = vmatprep.subr.mxu0 %v563
  %785 = vmatpush1.msra.mxu0 %v562
  %786 = vmatprep.subr.mxu0 0.0
  %787 = vmatpush1.msra.mxu0 0.0
  %788 = vmatprep.subr.mxu0 0.0
  %789 = vmatpush1.msra.mxu0 0.0
  %790 = vmatprep.subr.mxu0 0.0
  %791 = vmatpush1.msra.mxu0 0.0
  %792 = vmatprep.subr.mxu0 0.0
  %793 = vmatpush1.msra.mxu0 0.0
  %794 = vmatprep.subr.mxu0 0.0
  %795 = vmatpush1.msra.mxu0 0.0
  %796 = vmatprep.subr.mxu0 0.0
  %797 = vmatpush1.msra.mxu0 0.0
  %798 = vmatprep.subr.mxu0 0.0
  %799 = vmatpush1.msra.mxu0 0.0
  %800 = vmatprep.subr.mxu0 0.0
  %801 = vmatpush1.msra.mxu0 0.0
  %802 = vmatprep.subr.mxu0 0.0
  %803 = vmatpush1.msra.mxu0 0.0
  %804 = vmatprep.subr.mxu0 0.0
  %805 = vmatpush1.msra.mxu0 0.0
  %806 = vmatprep.subr.mxu0 0.0
  %807 = vmatpush1.msra.mxu0 0.0
  %808 = vmatprep.subr.mxu0 0.0
  %809 = vmatpush1.msra.mxu0 0.0
  %810 = vmatprep.subr.mxu0 0.0
  %811 = vmatpush1.msra.mxu0 0.0
  %812 = vmatprep.subr.mxu0 0.0
  %813 = vmatpush1.msra.mxu0 0.0
  %814 = vmatprep.subr.mxu0 0.0
  %815 = vmatpush1.msra.mxu0 0.0
  %816 = vmatprep.subr.mxu0 0.0
  %817 = vmatpush1.msra.mxu0 0.0
  %818 = vmatprep.subr.mxu0 0.0
  %819 = vmatpush1.msra.mxu0 0.0
  %820 = vmatprep.subr.mxu0 0.0
  %821 = vmatpush1.msra.mxu0 0.0
  %822 = vmatprep.subr.mxu0 0.0
  %823 = vmatpush1.msra.mxu0 0.0
  %824 = vmatprep.subr.mxu0 0.0
  %825 = vmatpush1.msra.mxu0 0.0
  %826 = vmatprep.subr.mxu0 0.0
  %827 = vmatpush1.msra.mxu0 0.0
  %828 = vmatprep.subr.mxu0 0.0
  %829 = vmatpush1.msra.mxu0 0.0
  %830 = vmatprep.subr.mxu0 0.0
  %831 = vmatpush1.msra.mxu0 0.0
  %832 = vmatprep.subr.mxu0 0.0
  %833 = vmatpush1.msra.mxu0 0.0
  %834 = vmatprep.subr.mxu0 0.0
  %835 = vmatpush1.msra.mxu0 0.0
  %836 = vmatprep.subr.mxu0 0.0
  %837 = vmatpush1.msra.mxu0 0.0
  %838 = vmatprep.subr.mxu0 0.0
  %839 = vmatpush1.msra.mxu0 0.0
  %840 = vmatprep.subr.mxu0 0.0
  %841 = vmatpush1.msra.mxu0 0.0
  %842 = vmatprep.subr.mxu0 0.0
  %843 = vmatpush1.msra.mxu0 0.0
  %844 = vmatprep.subr.mxu0 0.0
  %845 = vmatpush1.msra.mxu0 0.0
  %846 = vmatprep.subr.mxu0 0.0
  %847 = vmatpush1.msra.mxu0 0.0
  %848 = vmatprep.mubr.f32.mxu0 0.0
  %849 = vmatmul.mubr.f32.gmra.mrb[0].mxu0 %v711
  %v850 = vpop.f32.mrb[0].mxu0
  %v851 = vadd.f32 0.0, %v850
  %v852 = vpop.f32.mrb[0].mxu0
  %v853 = vadd.f32 0.0, %v852
  %854 = vdwg.mxu0
  %v855 = vsub.f32 %v364, %v780
  %v856 = vsub.f32 %v366, %v782
  %v857 = vsub.f32 %v506, %v851
  %v858 = vsub.f32 %v508, %v853
  %v859 = vmul.f32 %v855, %v855
  %v860 = vmul.f32 %v856, %v856
  %v861 = vmul.f32 %v857, %v857
  %v862 = vmul.f32 %v858, %v858
  %v864 = vsel %vm564, %v862, 0
  %866 = vmatprep.subr.mxu0 0.0
  %867 = vmatpush1.msra.mxu0 %v510
  %868 = vmatprep.subr.mxu0 0.0
  %869 = vmatpush1.msra.mxu0 %v511
  %870 = vmatprep.subr.mxu0 0.0
  %871 = vmatpush1.msra.mxu0 %v512
  %872 = vmatprep.subr.mxu0 0.0
  %873 = vmatpush1.msra.mxu0 %v513
  %874 = vmatprep.subr.mxu0 0.0
  %875 = vmatpush1.msra.mxu0 %v514
  %876 = vmatprep.subr.mxu0 0.0
  %877 = vmatpush1.msra.mxu0 %v515
  %878 = vmatprep.subr.mxu0 0.0
  %879 = vmatpush1.msra.mxu0 %v516
  %880 = vmatprep.subr.mxu0 0.0
  %881 = vmatpush1.msra.mxu0 %v517
  %882 = vmatprep.subr.mxu0 0.0
  %883 = vmatpush1.msra.mxu0 %v518
  %884 = vmatprep.subr.mxu0 0.0
  %885 = vmatpush1.msra.mxu0 %v519
  %886 = vmatprep.subr.mxu0 0.0
  %887 = vmatpush1.msra.mxu0 %v520
  %888 = vmatprep.subr.mxu0 0.0
  %889 = vmatpush1.msra.mxu0 %v521
  %890 = vmatprep.subr.mxu0 0.0
  %891 = vmatpush1.msra.mxu0 %v522
  %892 = vmatprep.subr.mxu0 0.0
  %893 = vmatpush1.msra.mxu0 %v523
  %894 = vmatprep.subr.mxu0 0.0
  %895 = vmatpush1.msra.mxu0 %v524
  %896 = vmatprep.subr.mxu0 0.0
  %897 = vmatpush1.msra.mxu0 %v525
  %898 = vmatprep.subr.mxu0 0.0
  %899 = vmatpush1.msra.mxu0 %v526
  %900 = vmatprep.subr.mxu0 0.0
  %901 = vmatpush1.msra.mxu0 %v527
  %902 = vmatprep.subr.mxu0 0.0
  %903 = vmatpush1.msra.mxu0 %v528
  %904 = vmatprep.subr.mxu0 0.0
  %905 = vmatpush1.msra.mxu0 %v529
  %906 = vmatprep.subr.mxu0 0.0
  %907 = vmatpush1.msra.mxu0 %v530
  %908 = vmatprep.subr.mxu0 0.0
  %909 = vmatpush1.msra.mxu0 %v531
  %910 = vmatprep.subr.mxu0 0.0
  %911 = vmatpush1.msra.mxu0 %v532
  %912 = vmatprep.subr.mxu0 0.0
  %913 = vmatpush1.msra.mxu0 %v533
  %914 = vmatprep.subr.mxu0 0.0
  %915 = vmatpush1.msra.mxu0 %v534
  %916 = vmatprep.subr.mxu0 0.0
  %917 = vmatpush1.msra.mxu0 %v535
  %918 = vmatprep.subr.mxu0 0.0
  %919 = vmatpush1.msra.mxu0 %v536
  %920 = vmatprep.subr.mxu0 0.0
  %921 = vmatpush1.msra.mxu0 %v537
  %922 = vmatprep.subr.mxu0 0.0
  %923 = vmatpush1.msra.mxu0 %v538
  %924 = vmatprep.subr.mxu0 0.0
  %925 = vmatpush1.msra.mxu0 %v539
  %926 = vmatprep.subr.mxu0 0.0
  %927 = vmatpush1.msra.mxu0 %v540
  %928 = vmatprep.subr.mxu0 0.0
  %929 = vmatpush1.msra.mxu0 %v541
  %930 = vmatprep.mubr.f32.mxu0 %v860
  %931 = vmatmul.mubr.f32.gmra.mrb[0].mxu0 %v859
  %v932 = vpop.f32.mrb[0].mxu0
  %v933 = vadd.f32 0.0, %v932
  %v934 = vpop.f32.mrb[0].mxu0
  %935 = vdwg.mxu0
  %936 = vmatprep.subr.mxu0 0.0
  %937 = vmatpush1.msra.mxu0 %v542
  %938 = vmatprep.subr.mxu0 0.0
  %939 = vmatpush1.msra.mxu0 %v543
  %940 = vmatprep.subr.mxu0 0.0
  %941 = vmatpush1.msra.mxu0 %v544
  %942 = vmatprep.subr.mxu0 0.0
  %943 = vmatpush1.msra.mxu0 %v545
  %944 = vmatprep.subr.mxu0 0.0
  %945 = vmatpush1.msra.mxu0 %v546
  %946 = vmatprep.subr.mxu0 0.0
  %947 = vmatpush1.msra.mxu0 %v547
  %948 = vmatprep.subr.mxu0 0.0
  %949 = vmatpush1.msra.mxu0 %v548
  %950 = vmatprep.subr.mxu0 0.0
  %951 = vmatpush1.msra.mxu0 %v549
  %952 = vmatprep.subr.mxu0 0.0
  %953 = vmatpush1.msra.mxu0 %v550
  %954 = vmatprep.subr.mxu0 0.0
  %955 = vmatpush1.msra.mxu0 %v551
  %956 = vmatprep.subr.mxu0 0.0
  %957 = vmatpush1.msra.mxu0 %v552
  %958 = vmatprep.subr.mxu0 0.0
  %959 = vmatpush1.msra.mxu0 %v553
  %960 = vmatprep.subr.mxu0 0.0
  %961 = vmatpush1.msra.mxu0 %v554
  %962 = vmatprep.subr.mxu0 0.0
  %963 = vmatpush1.msra.mxu0 %v555
  %964 = vmatprep.subr.mxu0 0.0
  %965 = vmatpush1.msra.mxu0 %v556
  %966 = vmatprep.subr.mxu0 0.0
  %967 = vmatpush1.msra.mxu0 %v557
  %968 = vmatprep.subr.mxu0 0.0
  %969 = vmatpush1.msra.mxu0 %v558
  %970 = vmatprep.subr.mxu0 0.0
  %971 = vmatpush1.msra.mxu0 %v559
  %972 = vmatprep.subr.mxu0 0.0
  %973 = vmatpush1.msra.mxu0 0.0
  %974 = vmatprep.subr.mxu0 0.0
  %975 = vmatpush1.msra.mxu0 0.0
  %976 = vmatprep.subr.mxu0 0.0
  %977 = vmatpush1.msra.mxu0 0.0
  %978 = vmatprep.subr.mxu0 0.0
  %979 = vmatpush1.msra.mxu0 0.0
  %980 = vmatprep.subr.mxu0 0.0
  %981 = vmatpush1.msra.mxu0 0.0
  %982 = vmatprep.subr.mxu0 0.0
  %983 = vmatpush1.msra.mxu0 0.0
  %984 = vmatprep.subr.mxu0 0.0
  %985 = vmatpush1.msra.mxu0 0.0
  %986 = vmatprep.subr.mxu0 0.0
  %987 = vmatpush1.msra.mxu0 0.0
  %988 = vmatprep.subr.mxu0 0.0
  %989 = vmatpush1.msra.mxu0 0.0
  %990 = vmatprep.subr.mxu0 0.0
  %991 = vmatpush1.msra.mxu0 0.0
  %992 = vmatprep.subr.mxu0 0.0
  %993 = vmatpush1.msra.mxu0 0.0
  %994 = vmatprep.subr.mxu0 0.0
  %995 = vmatpush1.msra.mxu0 0.0
  %996 = vmatprep.subr.mxu0 0.0
  %997 = vmatpush1.msra.mxu0 0.0
  %998 = vmatprep.subr.mxu0 0.0
  %999 = vmatpush1.msra.mxu0 0.0
  %1000 = vmatprep.mubr.f32.mxu0 %v864
  %1001 = vmatmul.mubr.f32.gmra.mrb[0].mxu0 %v861
  %v1002 = vpop.f32.mrb[0].mxu0
  %v1003 = vadd.f32 %v933, %v1002
  %v1004 = vpop.f32.mrb[0].mxu0
  %1005 = vdwg.mxu0
  %v1006 = vmul.f32 %v1003, 0.02
  %v1008 = vsel %vm709, %v1006, 0
  %1010 = vmatprep.subr.mxu0 %v561
  %1011 = vmatpush1.msra.mxu0 %v560
  %1012 = vmatprep.subr.mxu0 0.0
  %1013 = vmatpush1.msra.mxu0 0.0
  %1014 = vmatprep.subr.mxu0 0.0
  %1015 = vmatpush1.msra.mxu0 0.0
  %1016 = vmatprep.subr.mxu0 0.0
  %1017 = vmatpush1.msra.mxu0 0.0
  %1018 = vmatprep.subr.mxu0 0.0
  %1019 = vmatpush1.msra.mxu0 0.0
  %1020 = vmatprep.subr.mxu0 0.0
  %1021 = vmatpush1.msra.mxu0 0.0
  %1022 = vmatprep.subr.mxu0 0.0
  %1023 = vmatpush1.msra.mxu0 0.0
  %1024 = vmatprep.subr.mxu0 0.0
  %1025 = vmatpush1.msra.mxu0 0.0
  %1026 = vmatprep.subr.mxu0 0.0
  %1027 = vmatpush1.msra.mxu0 0.0
  %1028 = vmatprep.subr.mxu0 0.0
  %1029 = vmatpush1.msra.mxu0 0.0
  %1030 = vmatprep.subr.mxu0 0.0
  %1031 = vmatpush1.msra.mxu0 0.0
  %1032 = vmatprep.subr.mxu0 0.0
  %1033 = vmatpush1.msra.mxu0 0.0
  %1034 = vmatprep.subr.mxu0 0.0
  %1035 = vmatpush1.msra.mxu0 0.0
  %1036 = vmatprep.subr.mxu0 0.0
  %1037 = vmatpush1.msra.mxu0 0.0
  %1038 = vmatprep.subr.mxu0 0.0
  %1039 = vmatpush1.msra.mxu0 0.0
  %1040 = vmatprep.subr.mxu0 0.0
  %1041 = vmatpush1.msra.mxu0 0.0
  %1042 = vmatprep.subr.mxu0 0.0
  %1043 = vmatpush1.msra.mxu0 0.0
  %1044 = vmatprep.subr.mxu0 0.0
  %1045 = vmatpush1.msra.mxu0 0.0
  %1046 = vmatprep.subr.mxu0 0.0
  %1047 = vmatpush1.msra.mxu0 0.0
  %1048 = vmatprep.subr.mxu0 0.0
  %1049 = vmatpush1.msra.mxu0 0.0
  %1050 = vmatprep.subr.mxu0 0.0
  %1051 = vmatpush1.msra.mxu0 0.0
  %1052 = vmatprep.subr.mxu0 0.0
  %1053 = vmatpush1.msra.mxu0 0.0
  %1054 = vmatprep.subr.mxu0 0.0
  %1055 = vmatpush1.msra.mxu0 0.0
  %1056 = vmatprep.subr.mxu0 0.0
  %1057 = vmatpush1.msra.mxu0 0.0
  %1058 = vmatprep.subr.mxu0 0.0
  %1059 = vmatpush1.msra.mxu0 0.0
  %1060 = vmatprep.subr.mxu0 0.0
  %1061 = vmatpush1.msra.mxu0 0.0
  %1062 = vmatprep.subr.mxu0 0.0
  %1063 = vmatpush1.msra.mxu0 0.0
  %1064 = vmatprep.subr.mxu0 0.0
  %1065 = vmatpush1.msra.mxu0 0.0
  %1066 = vmatprep.subr.mxu0 0.0
  %1067 = vmatpush1.msra.mxu0 0.0
  %1068 = vmatprep.subr.mxu0 0.0
  %1069 = vmatpush1.msra.mxu0 0.0
  %1070 = vmatprep.subr.mxu0 0.0
  %1071 = vmatpush1.msra.mxu0 0.0
  %1072 = vmatprep.subr.mxu0 0.0
  %1073 = vmatpush1.msra.mxu0 0.0
  %1074 = vmatprep.mubr.f32.mxu0 0.0
  %1075 = vmatmul.mubr.f32.gmra.mrb[0].mxu0 %v1008
  %v1076 = vpop.f32.mrb[0].mxu0
  %v1077 = vadd.f32 1e-05, %v1076
  %v1078 = vpop.f32.mrb[0].mxu0
  %v1079 = vadd.f32 1e-05, %v1078
  %1080 = vdwg.mxu0
  %1081 = vmatprep.subr.mxu0 %v563
  %1082 = vmatpush1.msra.mxu0 %v562
  %1083 = vmatprep.subr.mxu0 0.0
  %1084 = vmatpush1.msra.mxu0 0.0
  %1085 = vmatprep.subr.mxu0 0.0
  %1086 = vmatpush1.msra.mxu0 0.0
  %1087 = vmatprep.subr.mxu0 0.0
  %1088 = vmatpush1.msra.mxu0 0.0
  %1089 = vmatprep.subr.mxu0 0.0
  %1090 = vmatpush1.msra.mxu0 0.0
  %1091 = vmatprep.subr.mxu0 0.0
  %1092 = vmatpush1.msra.mxu0 0.0
  %1093 = vmatprep.subr.mxu0 0.0
  %1094 = vmatpush1.msra.mxu0 0.0
  %1095 = vmatprep.subr.mxu0 0.0
  %1096 = vmatpush1.msra.mxu0 0.0
  %1097 = vmatprep.subr.mxu0 0.0
  %1098 = vmatpush1.msra.mxu0 0.0
  %1099 = vmatprep.subr.mxu0 0.0
  %1100 = vmatpush1.msra.mxu0 0.0
  %1101 = vmatprep.subr.mxu0 0.0
  %1102 = vmatpush1.msra.mxu0 0.0
  %1103 = vmatprep.subr.mxu0 0.0
  %1104 = vmatpush1.msra.mxu0 0.0
  %1105 = vmatprep.subr.mxu0 0.0
  %1106 = vmatpush1.msra.mxu0 0.0
  %1107 = vmatprep.subr.mxu0 0.0
  %1108 = vmatpush1.msra.mxu0 0.0
  %1109 = vmatprep.subr.mxu0 0.0
  %1110 = vmatpush1.msra.mxu0 0.0
  %1111 = vmatprep.subr.mxu0 0.0
  %1112 = vmatpush1.msra.mxu0 0.0
  %1113 = vmatprep.subr.mxu0 0.0
  %1114 = vmatpush1.msra.mxu0 0.0
  %1115 = vmatprep.subr.mxu0 0.0
  %1116 = vmatpush1.msra.mxu0 0.0
  %1117 = vmatprep.subr.mxu0 0.0
  %1118 = vmatpush1.msra.mxu0 0.0
  %1119 = vmatprep.subr.mxu0 0.0
  %1120 = vmatpush1.msra.mxu0 0.0
  %1121 = vmatprep.subr.mxu0 0.0
  %1122 = vmatpush1.msra.mxu0 0.0
  %1123 = vmatprep.subr.mxu0 0.0
  %1124 = vmatpush1.msra.mxu0 0.0
  %1125 = vmatprep.subr.mxu0 0.0
  %1126 = vmatpush1.msra.mxu0 0.0
  %1127 = vmatprep.subr.mxu0 0.0
  %1128 = vmatpush1.msra.mxu0 0.0
  %1129 = vmatprep.subr.mxu0 0.0
  %1130 = vmatpush1.msra.mxu0 0.0
  %1131 = vmatprep.subr.mxu0 0.0
  %1132 = vmatpush1.msra.mxu0 0.0
  %1133 = vmatprep.subr.mxu0 0.0
  %1134 = vmatpush1.msra.mxu0 0.0
  %1135 = vmatprep.subr.mxu0 0.0
  %1136 = vmatpush1.msra.mxu0 0.0
  %1137 = vmatprep.subr.mxu0 0.0
  %1138 = vmatpush1.msra.mxu0 0.0
  %1139 = vmatprep.subr.mxu0 0.0
  %1140 = vmatpush1.msra.mxu0 0.0
  %1141 = vmatprep.subr.mxu0 0.0
  %1142 = vmatpush1.msra.mxu0 0.0
  %1143 = vmatprep.subr.mxu0 0.0
  %1144 = vmatpush1.msra.mxu0 0.0
  %1145 = vmatprep.mubr.f32.mxu0 0.0
  %1146 = vmatmul.mubr.f32.gmra.mrb[0].mxu0 %v1008
  %v1147 = vpop.f32.mrb[0].mxu0
  %v1148 = vadd.f32 1e-05, %v1147
  %v1149 = vpop.f32.mrb[0].mxu0
  %v1150 = vadd.f32 1e-05, %v1149
  %1151 = vdwg.mxu0
  %v1152 = vrsqrt.pop %v1077
  %v1153 = vrsqrt.pop %v1079
  %v1154 = vrsqrt.pop %v1148
  %v1155 = vrsqrt.pop %v1150
  %v1156 = vmul.f32 %v855, %v1152
  %v1157 = vmul.f32 %v856, %v1153
  %v1158 = vmul.f32 %v857, %v1154
  %v1159 = vmul.f32 %v858, %v1155
  %v1160 = vmax.f32 %v1156, 0.0
  %v1161 = vmax.f32 %v1157, 0.0
  %v1162 = vmax.f32 %v1158, 0.0
  %v1163 = vmax.f32 %v1159, 0.0
  %v1164 = vld [vmem:[%s3] sm:$0xff]
  %v1165 = vld [vmem:[%s3 + $0x8] sm:$0xff]
  %v1166 = vld [vmem:[%s3 + $0x10] sm:$0xff]
  %v1167 = vld [vmem:[%s3 + $0x18] sm:$0xff]
  %v1168 = vld [vmem:[%s3 + $0x20] sm:$0xff]
  %v1169 = vld [vmem:[%s3 + $0x28] sm:$0xff]
  %v1170 = vld [vmem:[%s3 + $0x30] sm:$0xff]
  %v1171 = vld [vmem:[%s3 + $0x38] sm:$0xff]
  %v1172 = vld [vmem:[%s3 + $0x40] sm:$0xff]
  %v1173 = vld [vmem:[%s3 + $0x48] sm:$0xff]
  %v1174 = vld [vmem:[%s3 + $0x50] sm:$0xff]
  %v1175 = vld [vmem:[%s3 + $0x58] sm:$0xff]
  %v1176 = vld [vmem:[%s3 + $0x60] sm:$0xff]
  %v1177 = vld [vmem:[%s3 + $0x68] sm:$0xff]
  %v1178 = vld [vmem:[%s3 + $0x70] sm:$0xff]
  %v1179 = vld [vmem:[%s3 + $0x78] sm:$0xff]
  %v1180 = vld [vmem:[%s3 + $0x80] sm:$0xff]
  %v1181 = vld [vmem:[%s3 + $0x88] sm:$0xff]
  %v1182 = vld [vmem:[%s3 + $0x90] sm:$0xff]
  %v1183 = vld [vmem:[%s3 + $0x98] sm:$0xff]
  %v1184 = vld [vmem:[%s3 + $0xa0] sm:$0xff]
  %v1185 = vld [vmem:[%s3 + $0xa8] sm:$0xff]
  %v1186 = vld [vmem:[%s3 + $0xb0] sm:$0xff]
  %v1187 = vld [vmem:[%s3 + $0xb8] sm:$0xff]
  %v1188 = vld [vmem:[%s3 + $0xc0] sm:$0xff]
  %v1189 = vld [vmem:[%s3 + $0xc8] sm:$0xff]
  %v1190 = vld [vmem:[%s3 + $0xd0] sm:$0xff]
  %v1191 = vld [vmem:[%s3 + $0xd8] sm:$0xff]
  %v1192 = vld [vmem:[%s3 + $0xe0] sm:$0xff]
  %v1193 = vld [vmem:[%s3 + $0xe8] sm:$0xff]
  %v1194 = vld [vmem:[%s3 + $0xf0] sm:$0xff]
  %v1195 = vld [vmem:[%s3 + $0xf8] sm:$0xff]
  %v1196 = vld [vmem:[%s3 + $0x100] sm:$0xff]
  %v1197 = vld [vmem:[%s3 + $0x108] sm:$0xff]
  %v1198 = vld [vmem:[%s3 + $0x110] sm:$0xff]
  %v1199 = vld [vmem:[%s3 + $0x118] sm:$0xff]
  %v1200 = vld [vmem:[%s3 + $0x120] sm:$0xff]
  %v1201 = vld [vmem:[%s3 + $0x128] sm:$0xff]
  %v1202 = vld [vmem:[%s3 + $0x130] sm:$0xff]
  %v1203 = vld [vmem:[%s3 + $0x138] sm:$0xff]
  %v1204 = vld [vmem:[%s3 + $0x140] sm:$0xff]
  %v1205 = vld [vmem:[%s3 + $0x148] sm:$0xff]
  %v1206 = vld [vmem:[%s3 + $0x150] sm:$0xff]
  %v1207 = vld [vmem:[%s3 + $0x158] sm:$0xff]
  %v1208 = vld [vmem:[%s3 + $0x160] sm:$0xff]
  %v1209 = vld [vmem:[%s3 + $0x168] sm:$0xff]
  %v1210 = vld [vmem:[%s3 + $0x170] sm:$0xff]
  %v1211 = vld [vmem:[%s3 + $0x178] sm:$0xff]
  %v1212 = vld [vmem:[%s3 + $0x180] sm:$0xff]
  %v1213 = vld [vmem:[%s3 + $0x188] sm:$0xff]
  %v1214 = vld [vmem:[%s3 + $0x190] sm:$0xff]
  %v1215 = vld [vmem:[%s3 + $0x198] sm:$0xff]
  %v1216 = vld [vmem:[%s3 + $0x1a0] sm:$0xff]
  %v1217 = vld [vmem:[%s3 + $0x1a8] sm:$0xff]
  %v1218 = vld [vmem:[%s3 + $0x1b0] sm:$0xff]
  %v1219 = vld [vmem:[%s3 + $0x1b8] sm:$0xff]
  %v1220 = vld [vmem:[%s3 + $0x1c0] sm:$0xff]
  %v1221 = vld [vmem:[%s3 + $0x1c8] sm:$0xff]
  %v1222 = vld [vmem:[%s3 + $0x1d0] sm:$0xff]
  %v1223 = vld [vmem:[%s3 + $0x1d8] sm:$0xff]
  %v1224 = vld [vmem:[%s3 + $0x1e0] sm:$0xff]
  %v1225 = vld [vmem:[%s3 + $0x1e8] sm:$0xff]
  %v1226 = vld [vmem:[%s3 + $0x1f0] sm:$0xff]
  %v1227 = vld [vmem:[%s3 + $0x1f8] sm:$0xff]
  %v1228 = vld [vmem:[%s3 + $0x200] sm:$0xff]
  %v1229 = vld [vmem:[%s3 + $0x208] sm:$0xff]
  %v1230 = vld [vmem:[%s3 + $0x210] sm:$0xff]
  %v1231 = vld [vmem:[%s3 + $0x218] sm:$0xff]
  %v1232 = vld [vmem:[%s3 + $0x220] sm:$0xff]
  %v1233 = vld [vmem:[%s3 + $0x228] sm:$0xff]
  %v1234 = vld [vmem:[%s3 + $0x230] sm:$0xff]
  %v1235 = vld [vmem:[%s3 + $0x238] sm:$0xff]
  %v1236 = vld [vmem:[%s3 + $0x240] sm:$0xff]
  %v1237 = vld [vmem:[%s3 + $0x248] sm:$0xff]
  %v1238 = vld [vmem:[%s3 + $0x250] sm:$0xff]
  %v1239 = vld [vmem:[%s3 + $0x258] sm:$0xff]
  %v1240 = vld [vmem:[%s3 + $0x260] sm:$0xff]
  %v1241 = vld [vmem:[%s3 + $0x268] sm:$0xff]
  %v1242 = vld [vmem:[%s3 + $0x270] sm:$0xff]
  %v1243 = vld [vmem:[%s3 + $0x278] sm:$0xff]
  %v1244 = vld [vmem:[%s3 + $0x280] sm:$0xff]
  %v1245 = vld [vmem:[%s3 + $0x288] sm:$0xff]
  %v1246 = vld [vmem:[%s3 + $0x290] sm:$0xff]
  %v1247 = vld [vmem:[%s3 + $0x298] sm:$0xff]
  %v1248 = vld [vmem:[%s3 + $0x2a0] sm:$0xff]
  %v1249 = vld [vmem:[%s3 + $0x2a8] sm:$0xff]
  %v1250 = vld [vmem:[%s3 + $0x2b0] sm:$0xff]
  %v1251 = vld [vmem:[%s3 + $0x2b8] sm:$0xff]
  %v1252 = vld [vmem:[%s3 + $0x2c0] sm:$0xff]
  %v1253 = vld [vmem:[%s3 + $0x2c8] sm:$0xff]
  %v1254 = vld [vmem:[%s3 + $0x2d0] sm:$0xff]
  %v1255 = vld [vmem:[%s3 + $0x2d8] sm:$0xff]
  %v1256 = vld [vmem:[%s3 + $0x2e0] sm:$0xff]
  %v1257 = vld [vmem:[%s3 + $0x2e8] sm:$0xff]
  %v1258 = vld [vmem:[%s3 + $0x2f0] sm:$0xff]
  %v1259 = vld [vmem:[%s3 + $0x2f8] sm:$0xff]
  %v1260 = vld [vmem:[%s3 + $0x300] sm:$0xff]
  %v1261 = vld [vmem:[%s3 + $0x308] sm:$0xff]
  %v1262 = vld [vmem:[%s3 + $0x310] sm:$0xff]
  %v1263 = vld [vmem:[%s3 + $0x318] sm:$0xff]
  %v1264 = vld [vmem:[%s3 + $0x320] sm:$0xff]
  %v1265 = vld [vmem:[%s3 + $0x328] sm:$0xff]
  %v1266 = vld [vmem:[%s3 + $0x330] sm:$0xff]
  %v1267 = vld [vmem:[%s3 + $0x338] sm:$0xff]
  %v1268 = vld [vmem:[%s3 + $0x340] sm:$0xff]
  %v1269 = vld [vmem:[%s3 + $0x348] sm:$0xff]
  %v1270 = vld [vmem:[%s3 + $0x350] sm:$0xff]
  %v1271 = vld [vmem:[%s3 + $0x358] sm:$0xff]
  %v1272 = vld [vmem:[%s3 + $0x360] sm:$0xff]
  %v1273 = vld [vmem:[%s3 + $0x368] sm:$0xff]
  %v1274 = vld [vmem:[%s3 + $0x370] sm:$0xff]
  %v1275 = vld [vmem:[%s3 + $0x378] sm:$0xff]
  %v1276 = vld [vmem:[%s3 + $0x380] sm:$0xff]
  %v1277 = vld [vmem:[%s3 + $0x388] sm:$0xff]
  %v1278 = vld [vmem:[%s3 + $0x390] sm:$0xff]
  %v1279 = vld [vmem:[%s3 + $0x398] sm:$0xff]
  %v1280 = vld [vmem:[%s3 + $0x3a0] sm:$0xff]
  %v1281 = vld [vmem:[%s3 + $0x3a8] sm:$0xff]
  %v1282 = vld [vmem:[%s3 + $0x3b0] sm:$0xff]
  %v1283 = vld [vmem:[%s3 + $0x3b8] sm:$0xff]
  %v1284 = vld [vmem:[%s3 + $0x3c0] sm:$0xff]
  %v1285 = vld [vmem:[%s3 + $0x3c8] sm:$0xff]
  %v1286 = vld [vmem:[%s3 + $0x3d0] sm:$0xff]
  %v1287 = vld [vmem:[%s3 + $0x3d8] sm:$0xff]
  %v1288 = vld [vmem:[%s3 + $0x3e0] sm:$0xff]
  %v1289 = vld [vmem:[%s3 + $0x3e8] sm:$0xff]
  %v1290 = vld [vmem:[%s3 + $0x3f0] sm:$0xff]
  %v1291 = vld [vmem:[%s3 + $0x3f8] sm:$0xff]
  %v1292 = vld [vmem:[%s3 + $0x400] sm:$0xff]
  %v1293 = vld [vmem:[%s3 + $0x408] sm:$0xff]
  %v1294 = vld [vmem:[%s3 + $0x410] sm:$0xff]
  %v1295 = vld [vmem:[%s3 + $0x418] sm:$0xff]
  %v1296 = vld [vmem:[%s3 + $0x420] sm:$0xff]
  %v1297 = vld [vmem:[%s3 + $0x428] sm:$0xff]
  %v1298 = vld [vmem:[%s3 + $0x430] sm:$0xff]
  %v1299 = vld [vmem:[%s3 + $0x438] sm:$0xff]
  %v1300 = vld [vmem:[%s3 + $0x440] sm:$0xff]
  %v1301 = vld [vmem:[%s3 + $0x448] sm:$0xff]
  %v1302 = vld [vmem:[%s3 + $0x450] sm:$0xff]
  %v1303 = vld [vmem:[%s3 + $0x458] sm:$0xff]
  %v1304 = vld [vmem:[%s3 + $0x460] sm:$0xff]
  %v1305 = vld [vmem:[%s3 + $0x468] sm:$0xff]
  %v1306 = vld [vmem:[%s3 + $0x470] sm:$0xff]
  %v1307 = vld [vmem:[%s3 + $0x478] sm:$0xff]
  %v1308 = vld [vmem:[%s3 + $0x480] sm:$0xff]
  %v1309 = vld [vmem:[%s3 + $0x488] sm:$0xff]
  %v1310 = vld [vmem:[%s3 + $0x490] sm:$0xff]
  %v1311 = vld [vmem:[%s3 + $0x498] sm:$0xff]
  %v1312 = vld [vmem:[%s3 + $0x4a0] sm:$0xff]
  %v1313 = vld [vmem:[%s3 + $0x4a8] sm:$0xff]
  %v1314 = vld [vmem:[%s3 + $0x4b0] sm:$0xff]
  %v1315 = vld [vmem:[%s3 + $0x4b8] sm:$0xff]
  %v1316 = vld [vmem:[%s3 + $0x4c0] sm:$0xff]
  %v1317 = vld [vmem:[%s3 + $0x4c8] sm:$0xff]
  %v1318 = vld [vmem:[%s3 + $0x4d0] sm:$0xff]
  %v1319 = vld [vmem:[%s3 + $0x4d8] sm:$0xff]
  %v1320 = vld [vmem:[%s3 + $0x4e0] sm:$0xff]
  %v1321 = vld [vmem:[%s3 + $0x4e8] sm:$0xff]
  %v1322 = vld [vmem:[%s3 + $0x4f0] sm:$0xff]
  %v1323 = vld [vmem:[%s3 + $0x4f8] sm:$0xff]
  %v1324 = vld [vmem:[%s3 + $0x500] sm:$0xff]
  %v1325 = vld [vmem:[%s3 + $0x508] sm:$0xff]
  %v1326 = vld [vmem:[%s3 + $0x510] sm:$0xff]
  %v1327 = vld [vmem:[%s3 + $0x518] sm:$0xff]
  %v1328 = vld [vmem:[%s3 + $0x520] sm:$0xff]
  %v1329 = vld [vmem:[%s3 + $0x528] sm:$0xff]
  %v1330 = vld [vmem:[%s3 + $0x530] sm:$0xff]
  %v1331 = vld [vmem:[%s3 + $0x538] sm:$0xff]
  %v1332 = vld [vmem:[%s3 + $0x540] sm:$0xff]
  %v1333 = vld [vmem:[%s3 + $0x548] sm:$0xff]
  %v1334 = vld [vmem:[%s3 + $0x550] sm:$0xff]
  %v1335 = vld [vmem:[%s3 + $0x558] sm:$0xff]
  %v1336 = vld [vmem:[%s3 + $0x560] sm:$0xff]
  %v1337 = vld [vmem:[%s3 + $0x568] sm:$0xff]
  %v1338 = vld [vmem:[%s3 + $0x570] sm:$0xff]
  %v1339 = vld [vmem:[%s3 + $0x578] sm:$0xff]
  %v1340 = vld [vmem:[%s3 + $0x580] sm:$0xff]
  %v1341 = vld [vmem:[%s3 + $0x588] sm:$0xff]
  %v1342 = vld [vmem:[%s3 + $0x590] sm:$0xff]
  %v1343 = vld [vmem:[%s3 + $0x598] sm:$0xff]
  %v1344 = vld [vmem:[%s3 + $0x5a0] sm:$0xff]
  %v1345 = vld [vmem:[%s3 + $0x5a8] sm:$0xff]
  %v1346 = vld [vmem:[%s3 + $0x5b0] sm:$0xff]
  %v1347 = vld [vmem:[%s3 + $0x5b8] sm:$0xff]
  %v1348 = vld [vmem:[%s3 + $0x5c0] sm:$0xff]
  %v1349 = vld [vmem:[%s3 + $0x5c8] sm:$0xff]
  %v1350 = vld [vmem:[%s3 + $0x5d0] sm:$0xff]
  %v1351 = vld [vmem:[%s3 + $0x5d8] sm:$0xff]
  %v1352 = vld [vmem:[%s3 + $0x5e0] sm:$0xff]
  %v1353 = vld [vmem:[%s3 + $0x5e8] sm:$0xff]
  %v1354 = vld [vmem:[%s3 + $0x5f0] sm:$0xff]
  %v1355 = vld [vmem:[%s3 + $0x5f8] sm:$0xff]
  %v1356 = vld [vmem:[%s3 + $0x600] sm:$0xff]
  %v1357 = vld [vmem:[%s3 + $0x608] sm:$0xff]
  %v1358 = vld [vmem:[%s3 + $0x610] sm:$0xff]
  %v1359 = vld [vmem:[%s3 + $0x618] sm:$0xff]
  %v1360 = vld [vmem:[%s3 + $0x620] sm:$0xff]
  %v1361 = vld [vmem:[%s3 + $0x628] sm:$0xff]
  %v1362 = vld [vmem:[%s3 + $0x630] sm:$0xff]
  %v1363 = vld [vmem:[%s3 + $0x638] sm:$0xff]
  %v1364 = vld [vmem:[%s4] sm:$0xf]
  %v1366 = vlaneseq
  %v1367 = vshrl.u32 %v1366, 7
  %v1368 = vsub.s32 0, %v1367
  %v1369 = vrot.slane %v1364, %v1368
  %v1370 = vlaneseq
  %v1371 = vshrl.u32 %v1370, 7
  %v1372 = vsub.s32 1, %v1371
  %v1373 = vrot.slane %v1364, %v1372
  %v1374 = vlaneseq
  %v1375 = vshrl.u32 %v1374, 7
  %v1376 = vsub.s32 2, %v1375
  %v1377 = vrot.slane %v1364, %v1376
  %v1378 = vlaneseq
  %v1379 = vshrl.u32 %v1378, 7
  %v1380 = vsub.s32 3, %v1379
  %v1381 = vrot.slane %v1364, %v1380
  %v1387 = vsel %vm564, %v1163, 0
  %1389 = vmatprep.subr.mxu0 %v1165
  %1390 = vmatpush1.msra.mxu0 %v1164
  %1391 = vmatprep.subr.mxu0 %v1169
  %1392 = vmatpush1.msra.mxu0 %v1168
  %1393 = vmatprep.subr.mxu0 %v1173
  %1394 = vmatpush1.msra.mxu0 %v1172
  %1395 = vmatprep.subr.mxu0 %v1177
  %1396 = vmatpush1.msra.mxu0 %v1176
  %1397 = vmatprep.subr.mxu0 %v1181
  %1398 = vmatpush1.msra.mxu0 %v1180
  %1399 = vmatprep.subr.mxu0 %v1185
  %1400 = vmatpush1.msra.mxu0 %v1184
  %1401 = vmatprep.subr.mxu0 %v1189
  %1402 = vmatpush1.msra.mxu0 %v1188
  %1403 = vmatprep.subr.mxu0 %v1193
  %1404 = vmatpush1.msra.mxu0 %v1192
  %1405 = vmatprep.subr.mxu0 %v1197
  %1406 = vmatpush1.msra.mxu0 %v1196
  %1407 = vmatprep.subr.mxu0 %v1201
  %1408 = vmatpush1.msra.mxu0 %v1200
  %1409 = vmatprep.subr.mxu0 %v1205
  %1410 = vmatpush1.msra.mxu0 %v1204
  %1411 = vmatprep.subr.mxu0 %v1209
  %1412 = vmatpush1.msra.mxu0 %v1208
  %1413 = vmatprep.subr.mxu0 %v1213
  %1414 = vmatpush1.msra.mxu0 %v1212
  %1415 = vmatprep.subr.mxu0 %v1217
  %1416 = vmatpush1.msra.mxu0 %v1216
  %1417 = vmatprep.subr.mxu0 %v1221
  %1418 = vmatpush1.msra.mxu0 %v1220
  %1419 = vmatprep.subr.mxu0 %v1225
  %1420 = vmatpush1.msra.mxu0 %v1224
  %1421 = vmatprep.subr.mxu0 %v1229
  %1422 = vmatpush1.msra.mxu0 %v1228
  %1423 = vmatprep.subr.mxu0 %v1233
  %1424 = vmatpush1.msra.mxu0 %v1232
  %1425 = vmatprep.subr.mxu0 %v1237
  %1426 = vmatpush1.msra.mxu0 %v1236
  %1427 = vmatprep.subr.mxu0 %v1241
  %1428 = vmatpush1.msra.mxu0 %v1240
  %1429 = vmatprep.subr.mxu0 %v1245
  %1430 = vmatpush1.msra.mxu0 %v1244
  %1431 = vmatprep.subr.mxu0 %v1249
  %1432 = vmatpush1.msra.mxu0 %v1248
  %1433 = vmatprep.subr.mxu0 %v1253
  %1434 = vmatpush1.msra.mxu0 %v1252
  %1435 = vmatprep.subr.mxu0 %v1257
  %1436 = vmatpush1.msra.mxu0 %v1256
  %1437 = vmatprep.subr.mxu0 %v1261
  %1438 = vmatpush1.msra.mxu0 %v1260
  %1439 = vmatprep.subr.mxu0 %v1265
  %1440 = vmatpush1.msra.mxu0 %v1264
  %1441 = vmatprep.subr.mxu0 %v1269
  %1442 = vmatpush1.msra.mxu0 %v1268
  %1443 = vmatprep.subr.mxu0 %v1273
  %1444 = vmatpush1.msra.mxu0 %v1272
  %1445 = vmatprep.subr.mxu0 %v1277
  %1446 = vmatpush1.msra.mxu0 %v1276
  %1447 = vmatprep.subr.mxu0 %v1281
  %1448 = vmatpush1.msra.mxu0 %v1280
  %1449 = vmatprep.subr.mxu0 %v1285
  %1450 = vmatpush1.msra.mxu0 %v1284
  %1451 = vmatprep.subr.mxu0 %v1289
  %1452 = vmatpush1.msra.mxu0 %v1288
  %1453 = vmatprep.mubr.f32.mxu0 %v1161
  %1454 = vmatmul.mubr.f32.gmra.mrb[0].mxu0 %v1160
  %v1455 = vpop.f32.mrb[0].mxu0
  %v1456 = vadd.f32 %v1369, %v1455
  %v1457 = vpop.f32.mrb[0].mxu0
  %v1458 = vadd.f32 %v1373, %v1457
  %1459 = vdwg.mxu0
  %1460 = vmatprep.subr.mxu0 %v1293
  %1461 = vmatpush1.msra.mxu0 %v1292
  %1462 = vmatprep.subr.mxu0 %v1297
  %1463 = vmatpush1.msra.mxu0 %v1296
  %1464 = vmatprep.subr.mxu0 %v1301
  %1465 = vmatpush1.msra.mxu0 %v1300
  %1466 = vmatprep.subr.mxu0 %v1305
  %1467 = vmatpush1.msra.mxu0 %v1304
  %1468 = vmatprep.subr.mxu0 %v1309
  %1469 = vmatpush1.msra.mxu0 %v1308
  %1470 = vmatprep.subr.mxu0 %v1313
  %1471 = vmatpush1.msra.mxu0 %v1312
  %1472 = vmatprep.subr.mxu0 %v1317
  %1473 = vmatpush1.msra.mxu0 %v1316
  %1474 = vmatprep.subr.mxu0 %v1321
  %1475 = vmatpush1.msra.mxu0 %v1320
  %1476 = vmatprep.subr.mxu0 %v1325
  %1477 = vmatpush1.msra.mxu0 %v1324
  %1478 = vmatprep.subr.mxu0 %v1329
  %1479 = vmatpush1.msra.mxu0 %v1328
  %1480 = vmatprep.subr.mxu0 %v1333
  %1481 = vmatpush1.msra.mxu0 %v1332
  %1482 = vmatprep.subr.mxu0 %v1337
  %1483 = vmatpush1.msra.mxu0 %v1336
  %1484 = vmatprep.subr.mxu0 %v1341
  %1485 = vmatpush1.msra.mxu0 %v1340
  %1486 = vmatprep.subr.mxu0 %v1345
  %1487 = vmatpush1.msra.mxu0 %v1344
  %1488 = vmatprep.subr.mxu0 %v1349
  %1489 = vmatpush1.msra.mxu0 %v1348
  %1490 = vmatprep.subr.mxu0 %v1353
  %1491 = vmatpush1.msra.mxu0 %v1352
  %1492 = vmatprep.subr.mxu0 %v1357
  %1493 = vmatpush1.msra.mxu0 %v1356
  %1494 = vmatprep.subr.mxu0 %v1361
  %1495 = vmatpush1.msra.mxu0 %v1360
  %1496 = vmatprep.subr.mxu0 0.0
  %1497 = vmatpush1.msra.mxu0 0.0
  %1498 = vmatprep.subr.mxu0 0.0
  %1499 = vmatpush1.msra.mxu0 0.0
  %1500 = vmatprep.subr.mxu0 0.0
  %1501 = vmatpush1.msra.mxu0 0.0
  %1502 = vmatprep.subr.mxu0 0.0
  %1503 = vmatpush1.msra.mxu0 0.0
  %1504 = vmatprep.subr.mxu0 0.0
  %1505 = vmatpush1.msra.mxu0 0.0
  %1506 = vmatprep.subr.mxu0 0.0
  %1507 = vmatpush1.msra.mxu0 0.0
  %1508 = vmatprep.subr.mxu0 0.0
  %1509 = vmatpush1.msra.mxu0 0.0
  %1510 = vmatprep.subr.mxu0 0.0
  %1511 = vmatpush1.msra.mxu0 0.0
  %1512 = vmatprep.subr.mxu0 0.0
  %1513 = vmatpush1.msra.mxu0 0.0
  %1514 = vmatprep.subr.mxu0 0.0
  %1515 = vmatpush1.msra.mxu0 0.0
  %1516 = vmatprep.subr.mxu0 0.0
  %1517 = vmatpush1.msra.mxu0 0.0
  %1518 = vmatprep.subr.mxu0 0.0
  %1519 = vmatpush1.msra.mxu0 0.0
  %1520 = vmatprep.subr.mxu0 0.0
  %1521 = vmatpush1.msra.mxu0 0.0
  %1522 = vmatprep.subr.mxu0 0.0
  %1523 = vmatpush1.msra.mxu0 0.0
  %1524 = vmatprep.mubr.f32.mxu0 %v1387
  %1525 = vmatmul.mubr.f32.gmra.mrb[0].mxu0 %v1162
  %v1526 = vpop.f32.mrb[0].mxu0
  %v1527 = vadd.f32 %v1456, %v1526
  %v1528 = vpop.f32.mrb[0].mxu0
  %v1529 = vadd.f32 %v1458, %v1528
  %1530 = vdwg.mxu0
  %1531 = vmatprep.subr.mxu0 %v1167
  %1532 = vmatpush1.msra.mxu0 %v1166
  %1533 = vmatprep.subr.mxu0 %v1171
  %1534 = vmatpush1.msra.mxu0 %v1170
  %1535 = vmatprep.subr.mxu0 %v1175
  %1536 = vmatpush1.msra.mxu0 %v1174
  %1537 = vmatprep.subr.mxu0 %v1179
  %1538 = vmatpush1.msra.mxu0 %v1178
  %1539 = vmatprep.subr.mxu0 %v1183
  %1540 = vmatpush1.msra.mxu0 %v1182
  %1541 = vmatprep.subr.mxu0 %v1187
  %1542 = vmatpush1.msra.mxu0 %v1186
  %1543 = vmatprep.subr.mxu0 %v1191
  %1544 = vmatpush1.msra.mxu0 %v1190
  %1545 = vmatprep.subr.mxu0 %v1195
  %1546 = vmatpush1.msra.mxu0 %v1194
  %1547 = vmatprep.subr.mxu0 %v1199
  %1548 = vmatpush1.msra.mxu0 %v1198
  %1549 = vmatprep.subr.mxu0 %v1203
  %1550 = vmatpush1.msra.mxu0 %v1202
  %1551 = vmatprep.subr.mxu0 %v1207
  %1552 = vmatpush1.msra.mxu0 %v1206
  %1553 = vmatprep.subr.mxu0 %v1211
  %1554 = vmatpush1.msra.mxu0 %v1210
  %1555 = vmatprep.subr.mxu0 %v1215
  %1556 = vmatpush1.msra.mxu0 %v1214
  %1557 = vmatprep.subr.mxu0 %v1219
  %1558 = vmatpush1.msra.mxu0 %v1218
  %1559 = vmatprep.subr.mxu0 %v1223
  %1560 = vmatpush1.msra.mxu0 %v1222
  %1561 = vmatprep.subr.mxu0 %v1227
  %1562 = vmatpush1.msra.mxu0 %v1226
  %1563 = vmatprep.subr.mxu0 %v1231
  %1564 = vmatpush1.msra.mxu0 %v1230
  %1565 = vmatprep.subr.mxu0 %v1235
  %1566 = vmatpush1.msra.mxu0 %v1234
  %1567 = vmatprep.subr.mxu0 %v1239
  %1568 = vmatpush1.msra.mxu0 %v1238
  %1569 = vmatprep.subr.mxu0 %v1243
  %1570 = vmatpush1.msra.mxu0 %v1242
  %1571 = vmatprep.subr.mxu0 %v1247
  %1572 = vmatpush1.msra.mxu0 %v1246
  %1573 = vmatprep.subr.mxu0 %v1251
  %1574 = vmatpush1.msra.mxu0 %v1250
  %1575 = vmatprep.subr.mxu0 %v1255
  %1576 = vmatpush1.msra.mxu0 %v1254
  %1577 = vmatprep.subr.mxu0 %v1259
  %1578 = vmatpush1.msra.mxu0 %v1258
  %1579 = vmatprep.subr.mxu0 %v1263
  %1580 = vmatpush1.msra.mxu0 %v1262
  %1581 = vmatprep.subr.mxu0 %v1267
  %1582 = vmatpush1.msra.mxu0 %v1266
  %1583 = vmatprep.subr.mxu0 %v1271
  %1584 = vmatpush1.msra.mxu0 %v1270
  %1585 = vmatprep.subr.mxu0 %v1275
  %1586 = vmatpush1.msra.mxu0 %v1274
  %1587 = vmatprep.subr.mxu0 %v1279
  %1588 = vmatpush1.msra.mxu0 %v1278
  %1589 = vmatprep.subr.mxu0 %v1283
  %1590 = vmatpush1.msra.mxu0 %v1282
  %1591 = vmatprep.subr.mxu0 %v1287
  %1592 = vmatpush1.msra.mxu0 %v1286
  %1593 = vmatprep.subr.mxu0 %v1291
  %1594 = vmatpush1.msra.mxu0 %v1290
  %1595 = vmatprep.mubr.f32.mxu0 %v1161
  %1596 = vmatmul.mubr.f32.gmra.mrb[0].mxu0 %v1160
  %v1597 = vpop.f32.mrb[0].mxu0
  %v1598 = vadd.f32 %v1377, %v1597
  %v1599 = vpop.f32.mrb[0].mxu0
  %v1600 = vadd.f32 %v1381, %v1599
  %1601 = vdwg.mxu0
  %1602 = vmatprep.subr.mxu0 %v1295
  %1603 = vmatpush1.msra.mxu0 %v1294
  %1604 = vmatprep.subr.mxu0 %v1299
  %1605 = vmatpush1.msra.mxu0 %v1298
  %1606 = vmatprep.subr.mxu0 %v1303
  %1607 = vmatpush1.msra.mxu0 %v1302
  %1608 = vmatprep.subr.mxu0 %v1307
  %1609 = vmatpush1.msra.mxu0 %v1306
  %1610 = vmatprep.subr.mxu0 %v1311
  %1611 = vmatpush1.msra.mxu0 %v1310
  %1612 = vmatprep.subr.mxu0 %v1315
  %1613 = vmatpush1.msra.mxu0 %v1314
  %1614 = vmatprep.subr.mxu0 %v1319
  %1615 = vmatpush1.msra.mxu0 %v1318
  %1616 = vmatprep.subr.mxu0 %v1323
  %1617 = vmatpush1.msra.mxu0 %v1322
  %1618 = vmatprep.subr.mxu0 %v1327
  %1619 = vmatpush1.msra.mxu0 %v1326
  %1620 = vmatprep.subr.mxu0 %v1331
  %1621 = vmatpush1.msra.mxu0 %v1330
  %1622 = vmatprep.subr.mxu0 %v1335
  %1623 = vmatpush1.msra.mxu0 %v1334
  %1624 = vmatprep.subr.mxu0 %v1339
  %1625 = vmatpush1.msra.mxu0 %v1338
  %1626 = vmatprep.subr.mxu0 %v1343
  %1627 = vmatpush1.msra.mxu0 %v1342
  %1628 = vmatprep.subr.mxu0 %v1347
  %1629 = vmatpush1.msra.mxu0 %v1346
  %1630 = vmatprep.subr.mxu0 %v1351
  %1631 = vmatpush1.msra.mxu0 %v1350
  %1632 = vmatprep.subr.mxu0 %v1355
  %1633 = vmatpush1.msra.mxu0 %v1354
  %1634 = vmatprep.subr.mxu0 %v1359
  %1635 = vmatpush1.msra.mxu0 %v1358
  %1636 = vmatprep.subr.mxu0 %v1363
  %1637 = vmatpush1.msra.mxu0 %v1362
  %1638 = vmatprep.subr.mxu0 0.0
  %1639 = vmatpush1.msra.mxu0 0.0
  %1640 = vmatprep.subr.mxu0 0.0
  %1641 = vmatpush1.msra.mxu0 0.0
  %1642 = vmatprep.subr.mxu0 0.0
  %1643 = vmatpush1.msra.mxu0 0.0
  %1644 = vmatprep.subr.mxu0 0.0
  %1645 = vmatpush1.msra.mxu0 0.0
  %1646 = vmatprep.subr.mxu0 0.0
  %1647 = vmatpush1.msra.mxu0 0.0
  %1648 = vmatprep.subr.mxu0 0.0
  %1649 = vmatpush1.msra.mxu0 0.0
  %1650 = vmatprep.subr.mxu0 0.0
  %1651 = vmatpush1.msra.mxu0 0.0
  %1652 = vmatprep.subr.mxu0 0.0
  %1653 = vmatpush1.msra.mxu0 0.0
  %1654 = vmatprep.subr.mxu0 0.0
  %1655 = vmatpush1.msra.mxu0 0.0
  %1656 = vmatprep.subr.mxu0 0.0
  %1657 = vmatpush1.msra.mxu0 0.0
  %1658 = vmatprep.subr.mxu0 0.0
  %1659 = vmatpush1.msra.mxu0 0.0
  %1660 = vmatprep.subr.mxu0 0.0
  %1661 = vmatpush1.msra.mxu0 0.0
  %1662 = vmatprep.subr.mxu0 0.0
  %1663 = vmatpush1.msra.mxu0 0.0
  %1664 = vmatprep.subr.mxu0 0.0
  %1665 = vmatpush1.msra.mxu0 0.0
  %1666 = vmatprep.mubr.f32.mxu0 %v1387
  %1667 = vmatmul.mubr.f32.gmra.mrb[0].mxu0 %v1162
  %v1668 = vpop.f32.mrb[0].mxu0
  %v1669 = vadd.f32 %v1598, %v1668
  %v1670 = vpop.f32.mrb[0].mxu0
  %v1671 = vadd.f32 %v1600, %v1670
  %1672 = vdwg.mxu0
  %v1673 = vld [vmem:[%s5] sm:$0xf]
  %v1675 = vlaneseq
  %v1676 = vshrl.u32 %v1675, 7
  %v1677 = vsub.s32 0, %v1676
  %v1678 = vrot.slane %v1673, %v1677
  %v1679 = vlaneseq
  %v1680 = vshrl.u32 %v1679, 7
  %v1681 = vsub.s32 1, %v1680
  %v1682 = vrot.slane %v1673, %v1681
  %v1683 = vlaneseq
  %v1684 = vshrl.u32 %v1683, 7
  %v1685 = vsub.s32 2, %v1684
  %v1686 = vrot.slane %v1673, %v1685
  %v1687 = vlaneseq
  %v1688 = vshrl.u32 %v1687, 7
  %v1689 = vsub.s32 3, %v1688
  %v1690 = vrot.slane %v1673, %v1689
  %v1695 = vsub.f32 %v1527, %v1678
  %v1696 = vsub.f32 %v1529, %v1682
  %v1697 = vsub.f32 %v1669, %v1686
  %v1698 = vsub.f32 %v1671, %v1690
  %v1699 = vmul.f32 %v1695, %v1695
  %v1700 = vmul.f32 %v1696, %v1696
  %v1701 = vmul.f32 %v1697, %v1697
  %v1702 = vmul.f32 %v1698, %v1698
  %v1704 = vsel %vm564, %v1702, 0
  %1706 = vmatprep.subr.mxu0 0.0
  %1707 = vmatpush1.msra.mxu0 %v510
  %1708 = vmatprep.subr.mxu0 0.0
  %1709 = vmatpush1.msra.mxu0 %v511
  %1710 = vmatprep.subr.mxu0 0.0
  %1711 = vmatpush1.msra.mxu0 %v512
  %1712 = vmatprep.subr.mxu0 0.0
  %1713 = vmatpush1.msra.mxu0 %v513
  %1714 = vmatprep.subr.mxu0 0.0
  %1715 = vmatpush1.msra.mxu0 %v514
  %1716 = vmatprep.subr.mxu0 0.0
  %1717 = vmatpush1.msra.mxu0 %v515
  %1718 = vmatprep.subr.mxu0 0.0
  %1719 = vmatpush1.msra.mxu0 %v516
  %1720 = vmatprep.subr.mxu0 0.0
  %1721 = vmatpush1.msra.mxu0 %v517
  %1722 = vmatprep.subr.mxu0 0.0
  %1723 = vmatpush1.msra.mxu0 %v518
  %1724 = vmatprep.subr.mxu0 0.0
  %1725 = vmatpush1.msra.mxu0 %v519
  %1726 = vmatprep.subr.mxu0 0.0
  %1727 = vmatpush1.msra.mxu0 %v520
  %1728 = vmatprep.subr.mxu0 0.0
  %1729 = vmatpush1.msra.mxu0 %v521
  %1730 = vmatprep.subr.mxu0 0.0
  %1731 = vmatpush1.msra.mxu0 %v522
  %1732 = vmatprep.subr.mxu0 0.0
  %1733 = vmatpush1.msra.mxu0 %v523
  %1734 = vmatprep.subr.mxu0 0.0
  %1735 = vmatpush1.msra.mxu0 %v524
  %1736 = vmatprep.subr.mxu0 0.0
  %1737 = vmatpush1.msra.mxu0 %v525
  %1738 = vmatprep.subr.mxu0 0.0
  %1739 = vmatpush1.msra.mxu0 %v526
  %1740 = vmatprep.subr.mxu0 0.0
  %1741 = vmatpush1.msra.mxu0 %v527
  %1742 = vmatprep.subr.mxu0 0.0
  %1743 = vmatpush1.msra.mxu0 %v528
  %1744 = vmatprep.subr.mxu0 0.0
  %1745 = vmatpush1.msra.mxu0 %v529
  %1746 = vmatprep.subr.mxu0 0.0
  %1747 = vmatpush1.msra.mxu0 %v530
  %1748 = vmatprep.subr.mxu0 0.0
  %1749 = vmatpush1.msra.mxu0 %v531
  %1750 = vmatprep.subr.mxu0 0.0
  %1751 = vmatpush1.msra.mxu0 %v532
  %1752 = vmatprep.subr.mxu0 0.0
  %1753 = vmatpush1.msra.mxu0 %v533
  %1754 = vmatprep.subr.mxu0 0.0
  %1755 = vmatpush1.msra.mxu0 %v534
  %1756 = vmatprep.subr.mxu0 0.0
  %1757 = vmatpush1.msra.mxu0 %v535
  %1758 = vmatprep.subr.mxu0 0.0
  %1759 = vmatpush1.msra.mxu0 %v536
  %1760 = vmatprep.subr.mxu0 0.0
  %1761 = vmatpush1.msra.mxu0 %v537
  %1762 = vmatprep.subr.mxu0 0.0
  %1763 = vmatpush1.msra.mxu0 %v538
  %1764 = vmatprep.subr.mxu0 0.0
  %1765 = vmatpush1.msra.mxu0 %v539
  %1766 = vmatprep.subr.mxu0 0.0
  %1767 = vmatpush1.msra.mxu0 %v540
  %1768 = vmatprep.subr.mxu0 0.0
  %1769 = vmatpush1.msra.mxu0 %v541
  %1770 = vmatprep.mubr.f32.mxu0 %v1700
  %1771 = vmatmul.mubr.f32.gmra.mrb[0].mxu0 %v1699
  %v1772 = vpop.f32.mrb[0].mxu0
  %v1773 = vadd.f32 0.0, %v1772
  %v1774 = vpop.f32.mrb[0].mxu0
  %1775 = vdwg.mxu0
  %1776 = vmatprep.subr.mxu0 0.0
  %1777 = vmatpush1.msra.mxu0 %v542
  %1778 = vmatprep.subr.mxu0 0.0
  %1779 = vmatpush1.msra.mxu0 %v543
  %1780 = vmatprep.subr.mxu0 0.0
  %1781 = vmatpush1.msra.mxu0 %v544
  %1782 = vmatprep.subr.mxu0 0.0
  %1783 = vmatpush1.msra.mxu0 %v545
  %1784 = vmatprep.subr.mxu0 0.0
  %1785 = vmatpush1.msra.mxu0 %v546
  %1786 = vmatprep.subr.mxu0 0.0
  %1787 = vmatpush1.msra.mxu0 %v547
  %1788 = vmatprep.subr.mxu0 0.0
  %1789 = vmatpush1.msra.mxu0 %v548
  %1790 = vmatprep.subr.mxu0 0.0
  %1791 = vmatpush1.msra.mxu0 %v549
  %1792 = vmatprep.subr.mxu0 0.0
  %1793 = vmatpush1.msra.mxu0 %v550
  %1794 = vmatprep.subr.mxu0 0.0
  %1795 = vmatpush1.msra.mxu0 %v551
  %1796 = vmatprep.subr.mxu0 0.0
  %1797 = vmatpush1.msra.mxu0 %v552
  %1798 = vmatprep.subr.mxu0 0.0
  %1799 = vmatpush1.msra.mxu0 %v553
  %1800 = vmatprep.subr.mxu0 0.0
  %1801 = vmatpush1.msra.mxu0 %v554
  %1802 = vmatprep.subr.mxu0 0.0
  %1803 = vmatpush1.msra.mxu0 %v555
  %1804 = vmatprep.subr.mxu0 0.0
  %1805 = vmatpush1.msra.mxu0 %v556
  %1806 = vmatprep.subr.mxu0 0.0
  %1807 = vmatpush1.msra.mxu0 %v557
  %1808 = vmatprep.subr.mxu0 0.0
  %1809 = vmatpush1.msra.mxu0 %v558
  %1810 = vmatprep.subr.mxu0 0.0
  %1811 = vmatpush1.msra.mxu0 %v559
  %1812 = vmatprep.subr.mxu0 0.0
  %1813 = vmatpush1.msra.mxu0 0.0
  %1814 = vmatprep.subr.mxu0 0.0
  %1815 = vmatpush1.msra.mxu0 0.0
  %1816 = vmatprep.subr.mxu0 0.0
  %1817 = vmatpush1.msra.mxu0 0.0
  %1818 = vmatprep.subr.mxu0 0.0
  %1819 = vmatpush1.msra.mxu0 0.0
  %1820 = vmatprep.subr.mxu0 0.0
  %1821 = vmatpush1.msra.mxu0 0.0
  %1822 = vmatprep.subr.mxu0 0.0
  %1823 = vmatpush1.msra.mxu0 0.0
  %1824 = vmatprep.subr.mxu0 0.0
  %1825 = vmatpush1.msra.mxu0 0.0
  %1826 = vmatprep.subr.mxu0 0.0
  %1827 = vmatpush1.msra.mxu0 0.0
  %1828 = vmatprep.subr.mxu0 0.0
  %1829 = vmatpush1.msra.mxu0 0.0
  %1830 = vmatprep.subr.mxu0 0.0
  %1831 = vmatpush1.msra.mxu0 0.0
  %1832 = vmatprep.subr.mxu0 0.0
  %1833 = vmatpush1.msra.mxu0 0.0
  %1834 = vmatprep.subr.mxu0 0.0
  %1835 = vmatpush1.msra.mxu0 0.0
  %1836 = vmatprep.subr.mxu0 0.0
  %1837 = vmatpush1.msra.mxu0 0.0
  %1838 = vmatprep.subr.mxu0 0.0
  %1839 = vmatpush1.msra.mxu0 0.0
  %1840 = vmatprep.mubr.f32.mxu0 %v1704
  %1841 = vmatmul.mubr.f32.gmra.mrb[0].mxu0 %v1701
  %v1842 = vpop.f32.mrb[0].mxu0
  %v1843 = vadd.f32 %v1773, %v1842
  %v1844 = vpop.f32.mrb[0].mxu0
  %1845 = vdwg.mxu0
  %v1846 = vadd.f32 %v1843, 1.0
  %v1847 = vadd.f32 %v1843, 1e-05
  %v1848 = vrcp.pop %v1847
  %v1849 = vmul.f32 %v1846, %v1848
  %v1850 = vlog2.pop %v1849
  %v1851 = vmul.f32 %v1850, 0.6931472
  %v1852 = vld [vmem:[%s8] sm:$0xff]
  %v1854 = vsel %vm709, %v1851, 0
  %1856 = vmatprep.subr.mxu0 0.0
  %1857 = vmatpush1.msra.mxu0 %v1852
  %1858 = vmatprep.subr.mxu0 0.0
  %1859 = vmatpush1.msra.mxu0 0.0
  %1860 = vmatprep.subr.mxu0 0.0
  %1861 = vmatpush1.msra.mxu0 0.0
  %1862 = vmatprep.subr.mxu0 0.0
  %1863 = vmatpush1.msra.mxu0 0.0
  %1864 = vmatprep.subr.mxu0 0.0
  %1865 = vmatpush1.msra.mxu0 0.0
  %1866 = vmatprep.subr.mxu0 0.0
  %1867 = vmatpush1.msra.mxu0 0.0
  %1868 = vmatprep.subr.mxu0 0.0
  %1869 = vmatpush1.msra.mxu0 0.0
  %1870 = vmatprep.subr.mxu0 0.0
  %1871 = vmatpush1.msra.mxu0 0.0
  %1872 = vmatprep.subr.mxu0 0.0
  %1873 = vmatpush1.msra.mxu0 0.0
  %1874 = vmatprep.subr.mxu0 0.0
  %1875 = vmatpush1.msra.mxu0 0.0
  %1876 = vmatprep.subr.mxu0 0.0
  %1877 = vmatpush1.msra.mxu0 0.0
  %1878 = vmatprep.subr.mxu0 0.0
  %1879 = vmatpush1.msra.mxu0 0.0
  %1880 = vmatprep.subr.mxu0 0.0
  %1881 = vmatpush1.msra.mxu0 0.0
  %1882 = vmatprep.subr.mxu0 0.0
  %1883 = vmatpush1.msra.mxu0 0.0
  %1884 = vmatprep.subr.mxu0 0.0
  %1885 = vmatpush1.msra.mxu0 0.0
  %1886 = vmatprep.subr.mxu0 0.0
  %1887 = vmatpush1.msra.mxu0 0.0
  %1888 = vmatprep.subr.mxu0 0.0
  %1889 = vmatpush1.msra.mxu0 0.0
  %1890 = vmatprep.subr.mxu0 0.0
  %1891 = vmatpush1.msra.mxu0 0.0
  %1892 = vmatprep.subr.mxu0 0.0
  %1893 = vmatpush1.msra.mxu0 0.0
  %1894 = vmatprep.subr.mxu0 0.0
  %1895 = vmatpush1.msra.mxu0 0.0
  %1896 = vmatprep.subr.mxu0 0.0
  %1897 = vmatpush1.msra.mxu0 0.0
  %1898 = vmatprep.subr.mxu0 0.0
  %1899 = vmatpush1.msra.mxu0 0.0
  %1900 = vmatprep.subr.mxu0 0.0
  %1901 = vmatpush1.msra.mxu0 0.0
  %1902 = vmatprep.subr.mxu0 0.0
  %1903 = vmatpush1.msra.mxu0 0.0
  %1904 = vmatprep.subr.mxu0 0.0
  %1905 = vmatpush1.msra.mxu0 0.0
  %1906 = vmatprep.subr.mxu0 0.0
  %1907 = vmatpush1.msra.mxu0 0.0
  %1908 = vmatprep.subr.mxu0 0.0
  %1909 = vmatpush1.msra.mxu0 0.0
  %1910 = vmatprep.subr.mxu0 0.0
  %1911 = vmatpush1.msra.mxu0 0.0
  %1912 = vmatprep.subr.mxu0 0.0
  %1913 = vmatpush1.msra.mxu0 0.0
  %1914 = vmatprep.subr.mxu0 0.0
  %1915 = vmatpush1.msra.mxu0 0.0
  %1916 = vmatprep.subr.mxu0 0.0
  %1917 = vmatpush1.msra.mxu0 0.0
  %1918 = vmatprep.subr.mxu0 0.0
  %1919 = vmatpush1.msra.mxu0 0.0
  %1920 = vmatprep.mubr.f32.mxu0 0.0
  %1921 = vmatmul.mubr.f32.gmra.mrb[0].mxu0 %v1854
  %v1922 = vpop.f32.mrb[0].mxu0
  %v1923 = vadd.f32 0.0, %v1922
  %v1924 = vpop.f32.mrb[0].mxu0
  %1925 = vdwg.mxu0
  %v1926 = vtanh.pop %v1923
  %1927 = vst [vmem:[%s9] sm:$0xff] %v1926
  // Predicated region
  $region38: #{pwnet_forward.1} parent=0 // pred_check
    _
  $region39: #{pwnet_forward.1} parent=0 // pred_check_branch
    %1929 = sbr.rel (0) target = $region41
  $region40: #{pwnet_forward.1} parent=0 // pred_region
    _
  $region41: #{pwnet_forward.1} parent=0 // pred_fallthru
    _
  // Predicated region
  $region42: #{pwnet_forward.1} parent=0 // pred_check
    _
  $region43: #{pwnet_forward.1} parent=0 // pred_check_branch
    %1931 = sbr.rel (0) target = $region45
  $region44: #{pwnet_forward.1} parent=0 // pred_region
    _
  $region45: #{pwnet_forward.1} parent=0 // pred_fallthru
    _

</llo_original>
